<compile_context>
chip_gen: v6e
topology: v6e:2x2x1
jax: 0.10.0
libtpu: 0.0.40
codegen_flags: <defaults>
</compile_context>

<pallas_src>
import jax
import jax.numpy as jnp
from jax import lax
from jax.experimental import pallas as pl
from jax.experimental.pallas import tpu as pltpu

# ---- model hyper-parameters (small, consistent with the module) -------------
NUM_BRANCH = 6
DIM = 1                       # velocity dimension
C_DIM = 128                   # latent code dimension
HIDDEN = 64                   # hidden size of each decoder branch
BATCH = 8
NPATH = NUM_BRANCH + 1        # 6 control branches + vel_out, fused together
WIDE = NPATH * HIDDEN         # 448  (fused hidden width)
OUT_PAD = 128                 # lane-dense packed-output width
X_LANES = C_DIM + 2           # [ c (128) | velocity (1) | command (1) ]


def controller_kernel(x_ref, misc_ref, vinw2_ref, w1_ref, w2_ref, w3_ref, out_ref):
    f32, bf16 = jnp.float32, jnp.bfloat16
    B = x_ref.shape[0]

    # ---- fused activation slab: [c | velocity | command] -------------------
    c = x_ref[:, 0:C_DIM]                            # (B, C)  f32
    vel = x_ref[:, C_DIM:C_DIM + 1]                  # (B, 1)  f32 velocity
    cmdf = x_ref[:, C_DIM + 1:C_DIM + 2]             # (B, 1)  f32 command (small ints, exact)

    # ---- small f32 params from the single misc slab (static slices) --------
    vin_w1 = misc_ref[0:1, 0:HIDDEN]                 # (1, H)
    vin_b1 = misc_ref[1:2, 0:HIDDEN]                 # (1, H)
    vin_b2 = misc_ref[2:3, 0:C_DIM]                  # (1, C)
    b1_all = misc_ref[3:4, :]                        # (1, WIDE)
    b2_all = misc_ref[4:5, :]                        # (1, WIDE)
    b3_all = misc_ref[5:6, 0:OUT_PAD]                # (1, 128)

    # ---- bf16 weights feed the MXU directly (no f32 copies in VMEM) --------
    vin_w2 = vinw2_ref[...]                          # (H, C)      bf16
    w1_all = w1_ref[...]                             # (C, WIDE)   bf16 concat of 7 first layers
    w2_all = w2_ref[...]                             # (WIDE, WIDE) bf16 block-diagonal
    w3_all = w3_ref[...]                             # (WIDE, 128) bf16 block-diagonal, lane-padded

    # ---- vel_in MLP: (B,1) -> (B,H) -> (B,C); first layer is a broadcast mul
    h = jnp.maximum(vel * vin_w1 + vin_b1, 0.0)                                     # (B, H) f32
    vin = jnp.dot(h.astype(bf16), vin_w2, preferred_element_type=f32) + vin_b2      # (B, C) f32

    # PyTorch in-place `encoding += vel_in(...)` mutates c -> vel_out also sees it.
    enc = c + vin                                                                   # (B, C) f32

    # ---- fused decoder: 6 branches + vel_out as three wide bf16 matmuls ----
    h1 = jnp.maximum(
        jnp.dot(enc.astype(bf16), w1_all, preferred_element_type=f32) + b1_all, 0.0)   # (B, 448)
    h2 = jnp.maximum(
        jnp.dot(h1.astype(bf16), w2_all, preferred_element_type=f32) + b2_all, 0.0)    # (B, 448)
    raw = jnp.dot(h2.astype(bf16), w3_all, preferred_element_type=f32) + b3_all        # (B, 128)

    # ---- command select: iota lane mask + single where (post-sigmoid mask) --
    sig = jax.nn.sigmoid(raw)                                        # all 128 lanes (EUP)
    lane = lax.broadcasted_iota(jnp.int32, (B, OUT_PAD), 1)          # (B, 128)
    cmd_i = cmdf.astype(jnp.int32)                                   # (B, 1)
    start = 3 * (cmd_i - 1)                                          # (B, 1)
    sel = (lane >= start) & (lane < start + 3) & (lane < 3 * NUM_BRANCH)
    selected = jnp.where(sel, sig, 0.0)        # only the chosen branch's 3 lanes non-zero
    # (commands outside 1..NUM_BRANCH select no lanes -> ctrl == 0, like the reference)

    # ---- compact lanes {3i + j} -> lane j with XLU rolls --------------------
    # Rolls are issued in both directions so correctness does not depend on the
    # rotate sign convention: the unwanted direction only reads lanes >= 113,
    # which are zero in `selected` (nonzero lanes are all < 18).
    acc = selected
    for k in (3, 6, 9, 12, 15):
        acc = acc + pltpu.roll(selected, shift=k, axis=1) \
                  + pltpu.roll(selected, shift=OUT_PAD - k, axis=1)

    vel_pred = raw[:, 3 * NUM_BRANCH:3 * NUM_BRANCH + DIM]           # (B, 1) raw lane 18

    # ---- single lane-dense (B, 128) slab: [ctrl | vel_pred | zeros]; one store
    out_vals = jnp.where(lane < 3, acc, 0.0) + jnp.where(lane == 3, vel_pred, 0.0)
    out_ref[...] = out_vals.astype(out_ref.dtype)


def pack_params(params):
    """One-time packing of the 16 module tensors into 5 kernel arrays."""
    (vin_w1, vin_b1, vin_w2, vin_b2,
     vout_w1, vout_b1, vout_w2, vout_b2, vout_w3, vout_b3,
     br_w1, br_b1, br_w2, br_b2, br_w3, br_b3) = params
    f32, bf16 = jnp.float32, jnp.bfloat16
    H, C = HIDDEN, C_DIM

    # layer 1: concatenate along the output axis -> one (C, 448) matmul
    w1_all = jnp.concatenate([br_w1[i] for i in range(NUM_BRANCH)] + [vout_w1], axis=1)
    b1_all = jnp.concatenate([br_b1[i] for i in range(NUM_BRANCH)] + [vout_b1], axis=1)

    # layer 2: block-diagonal (448, 448) -> one matmul (extra zero FLOPs negligible at M=8)
    w2_all = jnp.zeros((WIDE, WIDE), f32)
    for i in range(NUM_BRANCH):
        w2_all = w2_all.at[i * H:(i + 1) * H, i * H:(i + 1) * H].set(br_w2[i])
    w2_all = w2_all.at[NUM_BRANCH * H:, NUM_BRANCH * H:].set(vout_w2)
    b2_all = jnp.concatenate([br_b2[i] for i in range(NUM_BRANCH)] + [vout_b2], axis=1)

    # layer 3: block-diagonal (448, 128); branch i -> cols [3i, 3i+3), vel_out -> col 18.
    w3_all = jnp.zeros((WIDE, OUT_PAD), f32)
    b3_all = jnp.zeros((1, OUT_PAD), f32)
    for i in range(NUM_BRANCH):
        w3_all = w3_all.at[i * H:(i + 1) * H, 3 * i:3 * i + 3].set(br_w3[i])
        b3_all = b3_all.at[:, 3 * i:3 * i + 3].set(br_b3[i])
    w3_all = w3_all.at[NUM_BRANCH * H:, 3 * NUM_BRANCH:3 * NUM_BRANCH + DIM].set(vout_w3)
    b3_all = b3_all.at[:, 3 * NUM_BRANCH:3 * NUM_BRANCH + DIM].set(vout_b3)

    # misc slab: all small f32 vectors/biases in one (8, 448) array -> one DMA
    misc = jnp.zeros((8, WIDE), f32)
    misc = misc.at[0, :H].set(vin_w1[0])
    misc = misc.at[1, :H].set(vin_b1[0])
    misc = misc.at[2, :C].set(vin_b2[0])
    misc = misc.at[3, :].set(b1_all[0])
    misc = misc.at[4, :].set(b2_all[0])
    misc = misc.at[5, :OUT_PAD].set(b3_all[0])

    # weights stay bf16 all the way into the MXU (make_params snaps them to
    # bf16-representable values, so the packing itself is lossless)
    return (misc,
            vin_w2.astype(bf16),
            w1_all.astype(bf16),
            w2_all.astype(bf16),
            w3_all.astype(bf16))


def controller_forward(c, velocity, command, packed):
    """c: (B, C_DIM) f32, velocity: (B,) f32, command: (B,) int32 (1..NUM_BRANCH)."""
    B = c.shape[0]
    # fold velocity and command into spare lanes of the c slab -> one activation DMA
    # (small-int commands are exact in f32, so the in-kernel compare is exact)
    x = jnp.concatenate(
        [c.astype(jnp.float32),
         velocity.reshape(B, 1).astype(jnp.float32),
         command.reshape(B, 1).astype(jnp.float32)], axis=1)          # (B, 130)

    misc, vin_w2, w1_all, w2_all, w3_all = packed
    args = (x, misc, vin_w2, w1_all, w2_all, w3_all)

    vmem = pl.BlockSpec(memory_space=pltpu.MemorySpace.VMEM)
    out = pl.pallas_call(
        controller_kernel,
        out_shape=jax.ShapeDtypeStruct((B, OUT_PAD), jnp.float32),
        in_specs=[vmem] * len(args),
        out_specs=vmem,
    )(*args)
    return out[:, 0:3], out[:, 3:3 + DIM]          # (control_pred, velocity_pred)


controller_forward_jit = jax.jit(controller_forward)


def make_params(key):
    """Deterministic parameter init (shapes match the PyTorch __init__).

    Weights are snapped to bf16-representable values so that storing them as
    bf16 for the kernel is lossless w.r.t. the f32 reference.
    """
    ks = jax.random.split(key, 32)
    k = iter(ks)

    def w(kk, shape, scale=0.05):
        v = jax.random.normal(kk, shape, jnp.float32) * scale
        return v.astype(jnp.bfloat16).astype(jnp.float32)

    # vel_in
    vin_w1 = w(next(k), (1, HIDDEN))
    vin_b1 = w(next(k), (1, HIDDEN))
    vin_w2 = w(next(k), (HIDDEN, C_DIM))
    vin_b2 = w(next(k), (1, C_DIM))
    # vel_out
    vout_w1 = w(next(k), (C_DIM, HIDDEN))
    vout_b1 = w(next(k), (1, HIDDEN))
    vout_w2 = w(next(k), (HIDDEN, HIDDEN))
    vout_b2 = w(next(k), (1, HIDDEN))
    vout_w3 = w(next(k), (HIDDEN, DIM))
    vout_b3 = w(next(k), (1, DIM))
    # branches, stacked over NUM_BRANCH
    br_w1 = w(next(k), (NUM_BRANCH, C_DIM, HIDDEN))
    br_b1 = w(next(k), (NUM_BRANCH, 1, HIDDEN))
    br_w2 = w(next(k), (NUM_BRANCH, HIDDEN, HIDDEN))
    br_b2 = w(next(k), (NUM_BRANCH, 1, HIDDEN))
    br_w3 = w(next(k), (NUM_BRANCH, HIDDEN, 3))
    br_b3 = w(next(k), (NUM_BRANCH, 1, 3))

    return (vin_w1, vin_b1, vin_w2, vin_b2,
            vout_w1, vout_b1, vout_w2, vout_b2, vout_w3, vout_b3,
            br_w1, br_b1, br_w2, br_b2, br_w3, br_b3)


def controller_reference(c, velocity, command, params):
    """Pure-JAX f32 reference mirroring the PyTorch forward (unfused, for validation)."""
    (vin_w1, vin_b1, vin_w2, vin_b2,
     vout_w1, vout_b1, vout_w2, vout_b2, vout_w3, vout_b3,
     br_w1, br_b1, br_w2, br_b2, br_w3, br_b3) = params
    B = c.shape[0]
    vel = velocity.reshape(B, 1)
    h = jnp.maximum(vel @ vin_w1 + vin_b1, 0.0)
    enc = c + (h @ vin_w2 + vin_b2)          # in-place += semantics: c is mutated
    ctrl = jnp.zeros((B, 3), jnp.float32)
    for i in range(NUM_BRANCH):
        h1 = jnp.maximum(enc @ br_w1[i] + br_b1[i], 0.0)
        h2 = jnp.maximum(h1 @ br_w2[i] + br_b2[i], 0.0)
        out = jax.nn.sigmoid(h2 @ br_w3[i] + br_b3[i])
        mask = (command.reshape(B, 1) == (i + 1)).astype(jnp.float32)
        ctrl = ctrl + out * mask
    g1 = jnp.maximum(enc @ vout_w1 + vout_b1, 0.0)
    g2 = jnp.maximum(g1 @ vout_w2 + vout_b2, 0.0)
    vp = g2 @ vout_w3 + vout_b3
    return ctrl, vp


if __name__ == "__main__":
    key = jax.random.PRNGKey(0)
    k_c, k_v, k_cmd, k_p = jax.random.split(key, 4)

    c = jax.random.normal(k_c, (BATCH, C_DIM), jnp.float32)
    velocity = jax.random.uniform(k_v, (BATCH,), jnp.float32) * 10.0
    command = jax.random.randint(k_cmd, (BATCH,), 1, NUM_BRANCH + 1, jnp.int32)
    params = make_params(k_p)
    packed = pack_params(params)          # one-time packing / bf16 cast

    ctrl, vel_pred = controller_forward_jit(c, velocity, command, packed)
    jax.block_until_ready((ctrl, vel_pred))

    ctrl_ref, vel_ref = controller_reference(c, velocity, command, params)
    assert ctrl.shape == (BATCH, 3) and vel_pred.shape == (BATCH, DIM)
    # Activations travel through the MXU as bf16 (weights are bf16-exact), so the
    # comparison against the pure-f32 reference uses a bf16-appropriate tolerance.
    assert jnp.allclose(ctrl, ctrl_ref, atol=2e-2, rtol=2e-2)
    assert jnp.allclose(vel_pred, vel_ref, atol=2e-2, rtol=2e-2)

    print("KERNEL_OK")
</pallas_src>

<mosaic_0001>
module attributes {stable_mosaic.version = 11 : i64} {
  func.func @controller_kernel(%arg0: memref<8x130xf32, #tpu.memory_space<vmem>>, %arg1: memref<8x448xf32, #tpu.memory_space<vmem>>, %arg2: memref<64x128xbf16, #tpu.memory_space<vmem>>, %arg3: memref<128x448xbf16, #tpu.memory_space<vmem>>, %arg4: memref<448x448xbf16, #tpu.memory_space<vmem>>, %arg5: memref<448x128xbf16, #tpu.memory_space<vmem>>, %arg6: memref<8x128xf32, #tpu.memory_space<vmem>>) attributes {dimension_semantics = [], scalar_prefetch = 0 : i64, scratch_operands = 0 : i64, tpu.core_type = #tpu.core_type<tc>} {
    %c0 = arith.constant 0 : index
    %c0_0 = arith.constant 0 : index
    %0 = vector.load %arg0[%c0, %c0_0] : memref<8x130xf32, #tpu.memory_space<vmem>>, vector<8x128xf32>
    %c0_1 = arith.constant 0 : index
    %c128 = arith.constant 128 : index
    %1 = vector.load %arg0[%c0_1, %c128] : memref<8x130xf32, #tpu.memory_space<vmem>>, vector<8x1xf32>
    %c0_2 = arith.constant 0 : index
    %c129 = arith.constant 129 : index
    %2 = vector.load %arg0[%c0_2, %c129] : memref<8x130xf32, #tpu.memory_space<vmem>>, vector<8x1xf32>
    %c0_3 = arith.constant 0 : index
    %c0_4 = arith.constant 0 : index
    %3 = vector.load %arg1[%c0_3, %c0_4] : memref<8x448xf32, #tpu.memory_space<vmem>>, vector<1x64xf32>
    %c1 = arith.constant 1 : index
    %c0_5 = arith.constant 0 : index
    %4 = vector.load %arg1[%c1, %c0_5] : memref<8x448xf32, #tpu.memory_space<vmem>>, vector<1x64xf32>
    %c2 = arith.constant 2 : index
    %c0_6 = arith.constant 0 : index
    %5 = vector.load %arg1[%c2, %c0_6] : memref<8x448xf32, #tpu.memory_space<vmem>>, vector<1x128xf32>
    %c3 = arith.constant 3 : index
    %c0_7 = arith.constant 0 : index
    %6 = vector.load %arg1[%c3, %c0_7] : memref<8x448xf32, #tpu.memory_space<vmem>>, vector<1x448xf32>
    %c4 = arith.constant 4 : index
    %c0_8 = arith.constant 0 : index
    %7 = vector.load %arg1[%c4, %c0_8] : memref<8x448xf32, #tpu.memory_space<vmem>>, vector<1x448xf32>
    %c5 = arith.constant 5 : index
    %c0_9 = arith.constant 0 : index
    %8 = vector.load %arg1[%c5, %c0_9] : memref<8x448xf32, #tpu.memory_space<vmem>>, vector<1x128xf32>
    %c0_10 = arith.constant 0 : index
    %c0_11 = arith.constant 0 : index
    %9 = vector.load %arg2[%c0_10, %c0_11] : memref<64x128xbf16, #tpu.memory_space<vmem>>, vector<64x128xbf16>
    %c0_12 = arith.constant 0 : index
    %c0_13 = arith.constant 0 : index
    %10 = vector.load %arg3[%c0_12, %c0_13] : memref<128x448xbf16, #tpu.memory_space<vmem>>, vector<128x448xbf16>
    %c0_14 = arith.constant 0 : index
    %c0_15 = arith.constant 0 : index
    %11 = vector.load %arg4[%c0_14, %c0_15] : memref<448x448xbf16, #tpu.memory_space<vmem>>, vector<448x448xbf16>
    %c0_16 = arith.constant 0 : index
    %c0_17 = arith.constant 0 : index
    %12 = vector.load %arg5[%c0_16, %c0_17] : memref<448x128xbf16, #tpu.memory_space<vmem>>, vector<448x128xbf16>
    %13 = vector.broadcast %1 : vector<8x1xf32> to vector<8x64xf32>
    %14 = vector.broadcast %3 : vector<1x64xf32> to vector<8x64xf32>
    %15 = arith.mulf %13, %14 : vector<8x64xf32>
    %16 = vector.broadcast %4 : vector<1x64xf32> to vector<8x64xf32>
    %17 = arith.addf %15, %16 : vector<8x64xf32>
    %cst = arith.constant 0.000000e+00 : f32
    %18 = vector.broadcast %cst : f32 to vector<8x64xf32>
    %19 = arith.maximumf %17, %18 : vector<8x64xf32>
    %20 = arith.truncf %19 : vector<8x64xf32> to vector<8x64xbf16>
    %cst_18 = arith.constant dense<0.000000e+00> : vector<8x128xf32>
    %21 = tpu.matmul %20, %9, %cst_18 {dimension_numbers = #tpu.dot_dimension_numbers<[1], [0], [0], [1], [0, 0, 1, 1], [], []>} : vector<8x64xbf16>, vector<64x128xbf16>, vector<8x128xf32> -> vector<8x128xf32>
    %22 = vector.broadcast %5 : vector<1x128xf32> to vector<8x128xf32>
    %23 = arith.addf %21, %22 : vector<8x128xf32>
    %24 = arith.addf %0, %23 : vector<8x128xf32>
    %25 = arith.truncf %24 : vector<8x128xf32> to vector<8x128xbf16>
    %cst_19 = arith.constant dense<0.000000e+00> : vector<8x448xf32>
    %26 = tpu.matmul %25, %10, %cst_19 {dimension_numbers = #tpu.dot_dimension_numbers<[1], [0], [0], [1], [0, 0, 1, 1], [], []>} : vector<8x128xbf16>, vector<128x448xbf16>, vector<8x448xf32> -> vector<8x448xf32>
    %27 = vector.broadcast %6 : vector<1x448xf32> to vector<8x448xf32>
    %28 = arith.addf %26, %27 : vector<8x448xf32>
    %cst_20 = arith.constant 0.000000e+00 : f32
    %29 = vector.broadcast %cst_20 : f32 to vector<8x448xf32>
    %30 = arith.maximumf %28, %29 : vector<8x448xf32>
    %31 = arith.truncf %30 : vector<8x448xf32> to vector<8x448xbf16>
    %cst_21 = arith.constant dense<0.000000e+00> : vector<8x448xf32>
    %32 = tpu.matmul %31, %11, %cst_21 {dimension_numbers = #tpu.dot_dimension_numbers<[1], [0], [0], [1], [0, 0, 1, 1], [], []>} : vector<8x448xbf16>, vector<448x448xbf16>, vector<8x448xf32> -> vector<8x448xf32>
    %33 = vector.broadcast %7 : vector<1x448xf32> to vector<8x448xf32>
    %34 = arith.addf %32, %33 : vector<8x448xf32>
    %cst_22 = arith.constant 0.000000e+00 : f32
    %35 = vector.broadcast %cst_22 : f32 to vector<8x448xf32>
    %36 = arith.maximumf %34, %35 : vector<8x448xf32>
    %37 = arith.truncf %36 : vector<8x448xf32> to vector<8x448xbf16>
    %cst_23 = arith.constant dense<0.000000e+00> : vector<8x128xf32>
    %38 = tpu.matmul %37, %12, %cst_23 {dimension_numbers = #tpu.dot_dimension_numbers<[1], [0], [0], [1], [0, 0, 1, 1], [], []>} : vector<8x448xbf16>, vector<448x128xbf16>, vector<8x128xf32> -> vector<8x128xf32>
    %39 = vector.broadcast %8 : vector<1x128xf32> to vector<8x128xf32>
    %40 = arith.addf %38, %39 : vector<8x128xf32>
    %41 = arith.negf %40 : vector<8x128xf32>
    %42 = math.exp %41 : vector<8x128xf32>
    %cst_24 = arith.constant 1.000000e+00 : f32
    %43 = vector.broadcast %cst_24 : f32 to vector<8x128xf32>
    %44 = arith.addf %43, %42 : vector<8x128xf32>
    %45 = arith.divf %43, %44 : vector<8x128xf32>
    %46 = tpu.iota {dimensions = array<i32: 1>} : vector<8x128xi32>
    %47 = arith.fptosi %2 : vector<8x1xf32> to vector<8x1xi32>
    %c1_i32 = arith.constant 1 : i32
    %48 = vector.broadcast %c1_i32 : i32 to vector<8x1xi32>
    %49 = arith.subi %47, %48 : vector<8x1xi32>
    %c3_i32 = arith.constant 3 : i32
    %50 = vector.broadcast %c3_i32 : i32 to vector<8x1xi32>
    %51 = arith.muli %50, %49 : vector<8x1xi32>
    %52 = vector.broadcast %51 : vector<8x1xi32> to vector<8x128xi32>
    %53 = arith.cmpi sge, %46, %52 : vector<8x128xi32>
    %c3_i32_25 = arith.constant 3 : i32
    %54 = vector.broadcast %c3_i32_25 : i32 to vector<8x1xi32>
    %55 = arith.addi %51, %54 : vector<8x1xi32>
    %56 = vector.broadcast %55 : vector<8x1xi32> to vector<8x128xi32>
    %57 = arith.cmpi slt, %46, %56 : vector<8x128xi32>
    %58 = arith.andi %53, %57 : vector<8x128xi1>
    %c18_i32 = arith.constant 18 : i32
    %59 = vector.broadcast %c18_i32 : i32 to vector<8x128xi32>
    %60 = arith.cmpi slt, %46, %59 : vector<8x128xi32>
    %61 = arith.andi %58, %60 : vector<8x128xi1>
    %cst_26 = arith.constant 0.000000e+00 : f32
    %62 = vector.broadcast %cst_26 : f32 to vector<8x128xf32>
    %63 = arith.select %61, %45, %62 : vector<8x128xi1>, vector<8x128xf32>
    %c3_i32_27 = arith.constant 3 : i32
    %64 = tpu.dynamic_rotate %63 by %c3_i32_27 dim 1 : vector<8x128xf32>, i32 -> vector<8x128xf32>
    %65 = arith.addf %63, %64 : vector<8x128xf32>
    %c125_i32 = arith.constant 125 : i32
    %66 = tpu.dynamic_rotate %63 by %c125_i32 dim 1 : vector<8x128xf32>, i32 -> vector<8x128xf32>
    %67 = arith.addf %65, %66 : vector<8x128xf32>
    %c6_i32 = arith.constant 6 : i32
    %68 = tpu.dynamic_rotate %63 by %c6_i32 dim 1 : vector<8x128xf32>, i32 -> vector<8x128xf32>
    %69 = arith.addf %67, %68 : vector<8x128xf32>
    %c122_i32 = arith.constant 122 : i32
    %70 = tpu.dynamic_rotate %63 by %c122_i32 dim 1 : vector<8x128xf32>, i32 -> vector<8x128xf32>
    %71 = arith.addf %69, %70 : vector<8x128xf32>
    %c9_i32 = arith.constant 9 : i32
    %72 = tpu.dynamic_rotate %63 by %c9_i32 dim 1 : vector<8x128xf32>, i32 -> vector<8x128xf32>
    %73 = arith.addf %71, %72 : vector<8x128xf32>
    %c119_i32 = arith.constant 119 : i32
    %74 = tpu.dynamic_rotate %63 by %c119_i32 dim 1 : vector<8x128xf32>, i32 -> vector<8x128xf32>
    %75 = arith.addf %73, %74 : vector<8x128xf32>
    %c12_i32 = arith.constant 12 : i32
    %76 = tpu.dynamic_rotate %63 by %c12_i32 dim 1 : vector<8x128xf32>, i32 -> vector<8x128xf32>
    %77 = arith.addf %75, %76 : vector<8x128xf32>
    %c116_i32 = arith.constant 116 : i32
    %78 = tpu.dynamic_rotate %63 by %c116_i32 dim 1 : vector<8x128xf32>, i32 -> vector<8x128xf32>
    %79 = arith.addf %77, %78 : vector<8x128xf32>
    %c15_i32 = arith.constant 15 : i32
    %80 = tpu.dynamic_rotate %63 by %c15_i32 dim 1 : vector<8x128xf32>, i32 -> vector<8x128xf32>
    %81 = arith.addf %79, %80 : vector<8x128xf32>
    %c113_i32 = arith.constant 113 : i32
    %82 = tpu.dynamic_rotate %63 by %c113_i32 dim 1 : vector<8x128xf32>, i32 -> vector<8x128xf32>
    %83 = arith.addf %81, %82 : vector<8x128xf32>
    %84 = vector.extract_strided_slice %40 {offsets = [0, 18], sizes = [8, 1], strides = [1, 1]} : vector<8x128xf32> to vector<8x1xf32>
    %c3_i32_28 = arith.constant 3 : i32
    %85 = vector.broadcast %c3_i32_28 : i32 to vector<8x128xi32>
    %86 = arith.cmpi slt, %46, %85 : vector<8x128xi32>
    %cst_29 = arith.constant 0.000000e+00 : f32
    %87 = vector.broadcast %cst_29 : f32 to vector<8x128xf32>
    %88 = arith.select %86, %83, %87 : vector<8x128xi1>, vector<8x128xf32>
    %c3_i32_30 = arith.constant 3 : i32
    %89 = vector.broadcast %c3_i32_30 : i32 to vector<8x128xi32>
    %90 = arith.cmpi eq, %46, %89 : vector<8x128xi32>
    %cst_31 = arith.constant 0.000000e+00 : f32
    %91 = vector.shape_cast %84 : vector<8x1xf32> to vector<8x1xf32>
    %92 = vector.broadcast %91 : vector<8x1xf32> to vector<8x128xf32>
    %93 = vector.broadcast %cst_31 : f32 to vector<8x128xf32>
    %94 = arith.select %90, %92, %93 : vector<8x128xi1>, vector<8x128xf32>
    %95 = arith.addf %88, %94 : vector<8x128xf32>
    %c0_32 = arith.constant 0 : index
    %c0_33 = arith.constant 0 : index
    %96 = vector.load %arg6[%c0_32, %c0_33] : memref<8x128xf32, #tpu.memory_space<vmem>>, vector<8x128xf32>
    tpu.vector_store %arg6[%c0_32, %c0_33], %95 {strides = array<i32>} : memref<8x128xf32, #tpu.memory_space<vmem>>, vector<8x128xf32>,
    return
  }
}

</mosaic_0001>

<llo_original>
// kernel: controller_forward.1
$region0: #{controller_forward.1}
  #allocation0 [shape = 'u32[]', space=smem, size = 0x4, offset = 0x4, fixed_abs, tag = 'smem constant byte address 0x4 - core index']
  #allocation1 [shape = 'u32[144,128]{1,0:T(1,128)}', space=vmem, size = 0x12000, scoped, tag = 'internal scratch']
  %s0 = inlined_call_operand.vmem [shape: f32[8,130], index: 0, kind: input, shape index: {}]
  %s1 = inlined_call_operand.vmem [shape: f32[8,448], index: 1, kind: input, shape index: {}]
  %s2 = inlined_call_operand.vmem [shape: bf16[64,128], index: 2, kind: input, shape index: {}]
  %s3 = inlined_call_operand.vmem [shape: bf16[128,448], index: 3, kind: input, shape index: {}]
  %s4 = inlined_call_operand.hbm [shape: bf16[448,448], index: 4, kind: input, shape index: {}]
  %s5 = inlined_call_operand.vmem [shape: bf16[448,128], index: 5, kind: input, shape index: {}]
  %s6 = inlined_call_operand.vmem [shape: f32[8,128], index: 6, kind: output, shape index: {}]
  %s7 = sld [smem:[#allocation0]]
  $region38: #{controller_forward.1} parent=0
    _
  %s9 = ssub.s32 1, %s7
  %s10 = scalar_select 0, %s9, %s7
  $region1: #{controller_forward.1} parent=0
    #allocation2 [shape = 'u8[458752]{0}', space=vmem, size = 0x70000, scoped, tag = 'input window, operand 4, single buffered']
    #allocation3 [shape = 's32[1]{0}', space=sflag, size = 0x4, scoped, tag = 'scoped memory for controller_forward.1']
    %11 = vsyncpa [#allocation3], 0
    // Predicated region
    $region2: #{controller_forward.1} parent=1 // pred_check
      _
    $region3: #{controller_forward.1} parent=1 // pred_check_branch
      %13 = sbr.rel (0) target = $region5
    $region4: #{controller_forward.1} parent=1 // pred_region
      _
    $region5: #{controller_forward.1} parent=1 // pred_fallthru
      _
    // Predicated region
    $region6: #{controller_forward.1} parent=1 // pred_check
      _
    $region7: #{controller_forward.1} parent=1 // pred_check_branch
      %15 = sbr.rel (0) target = $region9
    $region8: #{controller_forward.1} parent=1 // pred_region
      _
    $region9: #{controller_forward.1} parent=1 // pred_fallthru
      _
    // Predicated region
    $region10: #{controller_forward.1} parent=1 // pred_check
      _
    $region11: #{controller_forward.1} parent=1 // pred_check_branch
      %17 = sbr.rel (0) target = $region13
    $region12: #{controller_forward.1} parent=1 // pred_region
      _
    $region13: #{controller_forward.1} parent=1 // pred_fallthru
      _
    // Predicated region
    $region14: #{controller_forward.1} parent=1 // pred_check
      _
    $region15: #{controller_forward.1} parent=1 // pred_check_branch
      %19 = sbr.rel (0) target = $region17
    $region16: #{controller_forward.1} parent=1 // pred_region
      _
    $region17: #{controller_forward.1} parent=1 // pred_fallthru
      _
    // Predicated region
    $region18: #{controller_forward.1} parent=1 // pred_check
      _
    $region19: #{controller_forward.1} parent=1 // pred_check_branch
      %21 = sbr.rel (0) target = $region21
    $region20: #{controller_forward.1} parent=1 // pred_region
      %s23 = ssub.s32 14336, 14336
      %24 = vsyncadd [#allocation3], %s23
      %s25 = sshll.u32 [#allocation2], 4
      %s26 = int_to_ptr.vmem [resolvable:$true] %s25
      %31 = dma.hbm_to_vmem [thread:$0]  %s4, 14336, %s26, [#allocation3], 256, 256, 16
    $region21: #{controller_forward.1} parent=1 // pred_fallthru
      _
    // Predicated region
    $region22: #{controller_forward.1} parent=1 // pred_check
      _
    $region23: #{controller_forward.1} parent=1 // pred_check_branch
      %33 = sbr.rel (0) target = $region25
    $region24: #{controller_forward.1} parent=1 // pred_region
      _
    $region25: #{controller_forward.1} parent=1 // pred_fallthru
      _
    // Predicated region
    $region26: #{controller_forward.1} parent=1 // pred_check
      _
    $region27: #{controller_forward.1} parent=1 // pred_check_branch
      %35 = sbr.rel (0) target = $region29
    $region28: #{controller_forward.1} parent=1 // pred_region
      %36 = dma.done [#allocation3], 14336
    $region29: #{controller_forward.1} parent=1 // pred_fallthru
      _
    %v38 = vld [vmem:[%s0] sm:$0xff]
    %v39 = vld [vmem:[%s0 + $0x8] sm:$0xff]
    %v40 = vld [vmem:[%s1] ss:$0 sm:$0xff]
    %v41 = vld [vmem:[%s1 + $0x1] ss:$0 sm:$0xff]
    %v42 = vld [vmem:[%s1 + $0x2] ss:$0 sm:$0xff]
    %s43 = scalar_lea.vmem %s1, 3
    %v44 = vld [vmem:[%s43] ss:$8 sm:$0xf]
    %s45 = scalar_lea.vmem %s1, 4
    %v46 = vld [vmem:[%s45] ss:$8 sm:$0xf]
    %v47 = vld [vmem:[%s1 + $0x5] ss:$0 sm:$0xff]
    %v48 = vld [vmem:[%s2] sm:$0xf]
    %v49 = vld [vmem:[%s2 + $0x4] sm:$0xf]
    %v50 = vld [vmem:[%s2 + $0x8] sm:$0xf]
    %v51 = vld [vmem:[%s2 + $0xc] sm:$0xf]
    %v52 = vld [vmem:[%s2 + $0x10] sm:$0xf]
    %v53 = vld [vmem:[%s2 + $0x14] sm:$0xf]
    %v54 = vld [vmem:[%s2 + $0x18] sm:$0xf]
    %v55 = vld [vmem:[%s2 + $0x1c] sm:$0xf]
    %v56 = vld [vmem:[%s3] sm:$0xff]
    %v57 = vld [vmem:[%s3 + $0x8] sm:$0xff]
    %v58 = vld [vmem:[%s3 + $0x10] sm:$0xff]
    %v59 = vld [vmem:[%s3 + $0x18] sm:$0xff]
    %v60 = vld [vmem:[%s3 + $0x20] sm:$0xff]
    %v61 = vld [vmem:[%s3 + $0x28] sm:$0xff]
    %v62 = vld [vmem:[%s3 + $0x30] sm:$0xff]
    %v63 = vld [vmem:[%s3 + $0x38] sm:$0xff]
    %v64 = vld [vmem:[%s3 + $0x40] sm:$0xff]
    %v65 = vld [vmem:[%s3 + $0x48] sm:$0xff]
    %v66 = vld [vmem:[%s3 + $0x50] sm:$0xff]
    %v67 = vld [vmem:[%s3 + $0x58] sm:$0xff]
    %v68 = vld [vmem:[%s3 + $0x60] sm:$0xff]
    %v69 = vld [vmem:[%s3 + $0x68] sm:$0xff]
    %v70 = vld [vmem:[%s3 + $0x70] sm:$0xff]
    %v71 = vld [vmem:[%s3 + $0x78] sm:$0xff]
    %v72 = vld [vmem:[%s3 + $0x80] sm:$0xff]
    %v73 = vld [vmem:[%s3 + $0x88] sm:$0xff]
    %v74 = vld [vmem:[%s3 + $0x90] sm:$0xff]
    %v75 = vld [vmem:[%s3 + $0x98] sm:$0xff]
    %v76 = vld [vmem:[%s3 + $0xa0] sm:$0xff]
    %v77 = vld [vmem:[%s3 + $0xa8] sm:$0xff]
    %v78 = vld [vmem:[%s3 + $0xb0] sm:$0xff]
    %v79 = vld [vmem:[%s3 + $0xb8] sm:$0xff]
    %v80 = vld [vmem:[%s3 + $0xc0] sm:$0xff]
    %v81 = vld [vmem:[%s3 + $0xc8] sm:$0xff]
    %v82 = vld [vmem:[%s3 + $0xd0] sm:$0xff]
    %v83 = vld [vmem:[%s3 + $0xd8] sm:$0xff]
    %v84 = vld [vmem:[%s3 + $0xe0] sm:$0xff]
    %v85 = vld [vmem:[%s3 + $0xe8] sm:$0xff]
    %v86 = vld [vmem:[%s3 + $0xf0] sm:$0xff]
    %v87 = vld [vmem:[%s3 + $0xf8] sm:$0xff]
    %v88 = vld [vmem:[#allocation2] sm:$0xff]
    %v89 = vld [vmem:[#allocation2 + $0x8] sm:$0xff]
    %v90 = vld [vmem:[#allocation2 + $0x10] sm:$0xff]
    %v91 = vld [vmem:[#allocation2 + $0x18] sm:$0xff]
    %v92 = vld [vmem:[#allocation2 + $0x20] sm:$0xff]
    %v93 = vld [vmem:[#allocation2 + $0x28] sm:$0xff]
    %v94 = vld [vmem:[#allocation2 + $0x30] sm:$0xff]
    %v95 = vld [vmem:[#allocation2 + $0x38] sm:$0xff]
    %v96 = vld [vmem:[#allocation2 + $0x40] sm:$0xff]
    %v97 = vld [vmem:[#allocation2 + $0x48] sm:$0xff]
    %v98 = vld [vmem:[#allocation2 + $0x50] sm:$0xff]
    %v99 = vld [vmem:[#allocation2 + $0x58] sm:$0xff]
    %v100 = vld [vmem:[#allocation2 + $0x60] sm:$0xff]
    %v101 = vld [vmem:[#allocation2 + $0x68] sm:$0xff]
    %v102 = vld [vmem:[#allocation2 + $0x70] sm:$0xff]
    %v103 = vld [vmem:[#allocation2 + $0x78] sm:$0xff]
    %v104 = vld [vmem:[#allocation2 + $0x80] sm:$0xff]
    %v105 = vld [vmem:[#allocation2 + $0x88] sm:$0xff]
    %v106 = vld [vmem:[#allocation2 + $0x90] sm:$0xff]
    %v107 = vld [vmem:[#allocation2 + $0x98] sm:$0xff]
    %v108 = vld [vmem:[#allocation2 + $0xa0] sm:$0xff]
    %v109 = vld [vmem:[#allocation2 + $0xa8] sm:$0xff]
    %v110 = vld [vmem:[#allocation2 + $0xb0] sm:$0xff]
    %v111 = vld [vmem:[#allocation2 + $0xb8] sm:$0xff]
    %v112 = vld [vmem:[#allocation2 + $0xc0] sm:$0xff]
    %v113 = vld [vmem:[#allocation2 + $0xc8] sm:$0xff]
    %v114 = vld [vmem:[#allocation2 + $0xd0] sm:$0xff]
    %v115 = vld [vmem:[#allocation2 + $0xd8] sm:$0xff]
    %v116 = vld [vmem:[#allocation2 + $0xe0] sm:$0xff]
    %v117 = vld [vmem:[#allocation2 + $0xe8] sm:$0xff]
    %v118 = vld [vmem:[#allocation2 + $0xf0] sm:$0xff]
    %v119 = vld [vmem:[#allocation2 + $0xf8] sm:$0xff]
    %v120 = vld [vmem:[#allocation2 + $0x100] sm:$0xff]
    %v121 = vld [vmem:[#allocation2 + $0x108] sm:$0xff]
    %v122 = vld [vmem:[#allocation2 + $0x110] sm:$0xff]
    %v123 = vld [vmem:[#allocation2 + $0x118] sm:$0xff]
    %v124 = vld [vmem:[#allocation2 + $0x120] sm:$0xff]
    %v125 = vld [vmem:[#allocation2 + $0x128] sm:$0xff]
    %v126 = vld [vmem:[#allocation2 + $0x130] sm:$0xff]
    %v127 = vld [vmem:[#allocation2 + $0x138] sm:$0xff]
    %v128 = vld [vmem:[#allocation2 + $0x140] sm:$0xff]
    %v129 = vld [vmem:[#allocation2 + $0x148] sm:$0xff]
    %v130 = vld [vmem:[#allocation2 + $0x150] sm:$0xff]
    %v131 = vld [vmem:[#allocation2 + $0x158] sm:$0xff]
    %v132 = vld [vmem:[#allocation2 + $0x160] sm:$0xff]
    %v133 = vld [vmem:[#allocation2 + $0x168] sm:$0xff]
    %v134 = vld [vmem:[#allocation2 + $0x170] sm:$0xff]
    %v135 = vld [vmem:[#allocation2 + $0x178] sm:$0xff]
    %v136 = vld [vmem:[#allocation2 + $0x180] sm:$0xff]
    %v137 = vld [vmem:[#allocation2 + $0x188] sm:$0xff]
    %v138 = vld [vmem:[#allocation2 + $0x190] sm:$0xff]
    %v139 = vld [vmem:[#allocation2 + $0x198] sm:$0xff]
    %v140 = vld [vmem:[#allocation2 + $0x1a0] sm:$0xff]
    %v141 = vld [vmem:[#allocation2 + $0x1a8] sm:$0xff]
    %v142 = vld [vmem:[#allocation2 + $0x1b0] sm:$0xff]
    %v143 = vld [vmem:[#allocation2 + $0x1b8] sm:$0xff]
    %v144 = vld [vmem:[#allocation2 + $0x1c0] sm:$0xff]
    %v145 = vld [vmem:[#allocation2 + $0x1c8] sm:$0xff]
    %v146 = vld [vmem:[#allocation2 + $0x1d0] sm:$0xff]
    %v147 = vld [vmem:[#allocation2 + $0x1d8] sm:$0xff]
    %v148 = vld [vmem:[#allocation2 + $0x1e0] sm:$0xff]
    %v149 = vld [vmem:[#allocation2 + $0x1e8] sm:$0xff]
    %v150 = vld [vmem:[#allocation2 + $0x1f0] sm:$0xff]
    %v151 = vld [vmem:[#allocation2 + $0x1f8] sm:$0xff]
    %v152 = vld [vmem:[#allocation2 + $0x200] sm:$0xff]
    %v153 = vld [vmem:[#allocation2 + $0x208] sm:$0xff]
    %v154 = vld [vmem:[#allocation2 + $0x210] sm:$0xff]
    %v155 = vld [vmem:[#allocation2 + $0x218] sm:$0xff]
    %v156 = vld [vmem:[#allocation2 + $0x220] sm:$0xff]
    %v157 = vld [vmem:[#allocation2 + $0x228] sm:$0xff]
    %v158 = vld [vmem:[#allocation2 + $0x230] sm:$0xff]
    %v159 = vld [vmem:[#allocation2 + $0x238] sm:$0xff]
    %v160 = vld [vmem:[#allocation2 + $0x240] sm:$0xff]
    %v161 = vld [vmem:[#allocation2 + $0x248] sm:$0xff]
    %v162 = vld [vmem:[#allocation2 + $0x250] sm:$0xff]
    %v163 = vld [vmem:[#allocation2 + $0x258] sm:$0xff]
    %v164 = vld [vmem:[#allocation2 + $0x260] sm:$0xff]
    %v165 = vld [vmem:[#allocation2 + $0x268] sm:$0xff]
    %v166 = vld [vmem:[#allocation2 + $0x270] sm:$0xff]
    %v167 = vld [vmem:[#allocation2 + $0x278] sm:$0xff]
    %v168 = vld [vmem:[#allocation2 + $0x280] sm:$0xff]
    %v169 = vld [vmem:[#allocation2 + $0x288] sm:$0xff]
    %v170 = vld [vmem:[#allocation2 + $0x290] sm:$0xff]
    %v171 = vld [vmem:[#allocation2 + $0x298] sm:$0xff]
    %v172 = vld [vmem:[#allocation2 + $0x2a0] sm:$0xff]
    %v173 = vld [vmem:[#allocation2 + $0x2a8] sm:$0xff]
    %v174 = vld [vmem:[#allocation2 + $0x2b0] sm:$0xff]
    %v175 = vld [vmem:[#allocation2 + $0x2b8] sm:$0xff]
    %v176 = vld [vmem:[#allocation2 + $0x2c0] sm:$0xff]
    %v177 = vld [vmem:[#allocation2 + $0x2c8] sm:$0xff]
    %v178 = vld [vmem:[#allocation2 + $0x2d0] sm:$0xff]
    %v179 = vld [vmem:[#allocation2 + $0x2d8] sm:$0xff]
    %v180 = vld [vmem:[#allocation2 + $0x2e0] sm:$0xff]
    %v181 = vld [vmem:[#allocation2 + $0x2e8] sm:$0xff]
    %v182 = vld [vmem:[#allocation2 + $0x2f0] sm:$0xff]
    %v183 = vld [vmem:[#allocation2 + $0x2f8] sm:$0xff]
    %v184 = vld [vmem:[#allocation2 + $0x300] sm:$0xff]
    %v185 = vld [vmem:[#allocation2 + $0x308] sm:$0xff]
    %v186 = vld [vmem:[#allocation2 + $0x310] sm:$0xff]
    %v187 = vld [vmem:[#allocation2 + $0x318] sm:$0xff]
    %v188 = vld [vmem:[#allocation2 + $0x320] sm:$0xff]
    %v189 = vld [vmem:[#allocation2 + $0x328] sm:$0xff]
    %v190 = vld [vmem:[#allocation2 + $0x330] sm:$0xff]
    %v191 = vld [vmem:[#allocation2 + $0x338] sm:$0xff]
    %v192 = vld [vmem:[#allocation2 + $0x340] sm:$0xff]
    %v193 = vld [vmem:[#allocation2 + $0x348] sm:$0xff]
    %v194 = vld [vmem:[#allocation2 + $0x350] sm:$0xff]
    %v195 = vld [vmem:[#allocation2 + $0x358] sm:$0xff]
    %v196 = vld [vmem:[#allocation2 + $0x360] sm:$0xff]
    %v197 = vld [vmem:[#allocation2 + $0x368] sm:$0xff]
    %v198 = vld [vmem:[#allocation2 + $0x370] sm:$0xff]
    %v199 = vld [vmem:[#allocation2 + $0x378] sm:$0xff]
    %v200 = vld [vmem:[%s5] sm:$0xf]
    %v201 = vld [vmem:[%s5 + $0x4] sm:$0xf]
    %v202 = vld [vmem:[%s5 + $0x8] sm:$0xf]
    %v203 = vld [vmem:[%s5 + $0xc] sm:$0xf]
    %v204 = vld [vmem:[%s5 + $0x10] sm:$0xf]
    %v205 = vld [vmem:[%s5 + $0x14] sm:$0xf]
    %v206 = vld [vmem:[%s5 + $0x18] sm:$0xf]
    %v207 = vld [vmem:[%s5 + $0x1c] sm:$0xf]
    %v208 = vld [vmem:[%s5 + $0x20] sm:$0xf]
    %v209 = vld [vmem:[%s5 + $0x24] sm:$0xf]
    %v210 = vld [vmem:[%s5 + $0x28] sm:$0xf]
    %v211 = vld [vmem:[%s5 + $0x2c] sm:$0xf]
    %v212 = vld [vmem:[%s5 + $0x30] sm:$0xf]
    %v213 = vld [vmem:[%s5 + $0x34] sm:$0xf]
    %v214 = vld [vmem:[%s5 + $0x38] sm:$0xf]
    %v215 = vld [vmem:[%s5 + $0x3c] sm:$0xf]
    %v216 = vld [vmem:[%s5 + $0x40] sm:$0xf]
    %v217 = vld [vmem:[%s5 + $0x44] sm:$0xf]
    %v218 = vld [vmem:[%s5 + $0x48] sm:$0xf]
    %v219 = vld [vmem:[%s5 + $0x4c] sm:$0xf]
    %v220 = vld [vmem:[%s5 + $0x50] sm:$0xf]
    %v221 = vld [vmem:[%s5 + $0x54] sm:$0xf]
    %v222 = vld [vmem:[%s5 + $0x58] sm:$0xf]
    %v223 = vld [vmem:[%s5 + $0x5c] sm:$0xf]
    %v224 = vld [vmem:[%s5 + $0x60] sm:$0xf]
    %v225 = vld [vmem:[%s5 + $0x64] sm:$0xf]
    %v226 = vld [vmem:[%s5 + $0x68] sm:$0xf]
    %v227 = vld [vmem:[%s5 + $0x6c] sm:$0xf]
    %v228 = vld [vmem:[%s5 + $0x70] sm:$0xf]
    %v229 = vld [vmem:[%s5 + $0x74] sm:$0xf]
    %v230 = vld [vmem:[%s5 + $0x78] sm:$0xf]
    %v231 = vld [vmem:[%s5 + $0x7c] sm:$0xf]
    %v232 = vld [vmem:[%s5 + $0x80] sm:$0xf]
    %v233 = vld [vmem:[%s5 + $0x84] sm:$0xf]
    %v234 = vld [vmem:[%s5 + $0x88] sm:$0xf]
    %v235 = vld [vmem:[%s5 + $0x8c] sm:$0xf]
    %v236 = vld [vmem:[%s5 + $0x90] sm:$0xf]
    %v237 = vld [vmem:[%s5 + $0x94] sm:$0xf]
    %v238 = vld [vmem:[%s5 + $0x98] sm:$0xf]
    %v239 = vld [vmem:[%s5 + $0x9c] sm:$0xf]
    %v240 = vld [vmem:[%s5 + $0xa0] sm:$0xf]
    %v241 = vld [vmem:[%s5 + $0xa4] sm:$0xf]
    %v242 = vld [vmem:[%s5 + $0xa8] sm:$0xf]
    %v243 = vld [vmem:[%s5 + $0xac] sm:$0xf]
    %v244 = vld [vmem:[%s5 + $0xb0] sm:$0xf]
    %v245 = vld [vmem:[%s5 + $0xb4] sm:$0xf]
    %v246 = vld [vmem:[%s5 + $0xb8] sm:$0xf]
    %v247 = vld [vmem:[%s5 + $0xbc] sm:$0xf]
    %v248 = vld [vmem:[%s5 + $0xc0] sm:$0xf]
    %v249 = vld [vmem:[%s5 + $0xc4] sm:$0xf]
    %v250 = vld [vmem:[%s5 + $0xc8] sm:$0xf]
    %v251 = vld [vmem:[%s5 + $0xcc] sm:$0xf]
    %v252 = vld [vmem:[%s5 + $0xd0] sm:$0xf]
    %v253 = vld [vmem:[%s5 + $0xd4] sm:$0xf]
    %v254 = vld [vmem:[%s5 + $0xd8] sm:$0xf]
    %v255 = vld [vmem:[%s5 + $0xdc] sm:$0xf]
    %257 = vset.pattern.permute.xlu0 0
    %258 = vperm.xlu0 %257, %v39
    %v259 = vpop.permute.xlu0 %258
    %v261 = vmul.f32 %v259, %v40
    %v262 = vadd.f32 %v261, %v41
    %v263 = vmax.f32 %v262, 0.0
    %v264 = vpack.c.bf16 %v263, %v263
    %v273 = vunpack.c.l.b16 %v48
    %v274 = vunpack.c.l.b16 %v49
    %v275 = vunpack.c.l.b16 %v50
    %v276 = vunpack.c.l.b16 %v51
    %v277 = vunpack.c.l.b16 %v52
    %v278 = vunpack.c.l.b16 %v53
    %v279 = vunpack.c.l.b16 %v54
    %v280 = vunpack.c.l.b16 %v55
    %v281 = vpack.c.b16 %v274, %v273
    %v282 = vpack.c.b16 %v276, %v275
    %v283 = vpack.c.b16 %v278, %v277
    %v284 = vpack.c.b16 %v280, %v279
    %vm289 = vcmask 523264
    %v291 = vsel %vm289, %v264, 0
    %293 = vmatprep.subr.bf16.mxu0 0
    %294 = vmatpush1.bf16.msra.mxu0 0
    %295 = vmatprep.subr.bf16.mxu0 0
    %296 = vmatpush1.bf16.msra.mxu0 0
    %297 = vmatprep.subr.bf16.mxu0 0
    %298 = vmatpush1.bf16.msra.mxu0 0
    %299 = vmatprep.subr.bf16.mxu0 0
    %300 = vmatpush1.bf16.msra.mxu0 0
    %301 = vmatprep.subr.bf16.mxu0 0
    %302 = vmatpush1.bf16.msra.mxu0 %v284
    %303 = vmatprep.subr.bf16.mxu0 0
    %304 = vmatpush1.bf16.msra.mxu0 %v283
    %305 = vmatprep.subr.bf16.mxu0 0
    %306 = vmatpush1.bf16.msra.mxu0 %v282
    %307 = vmatprep.subr.bf16.mxu0 0
    %308 = vmatpush1.bf16.msra.mxu0 %v281
    %309 = vmatprep.subr.bf16.mxu0 0
    %310 = vmatpush2.bf16.msra.mxu0 0
    %311 = vmatprep.subr.bf16.mxu0 0
    %312 = vmatpush2.bf16.msra.mxu0 0
    %313 = vmatprep.subr.bf16.mxu0 0
    %314 = vmatpush2.bf16.msra.mxu0 0
    %315 = vmatprep.subr.bf16.mxu0 0
    %316 = vmatpush2.bf16.msra.mxu0 0
    %317 = vmatprep.subr.bf16.mxu0 0
    %318 = vmatpush2.bf16.msra.mxu0 0
    %319 = vmatprep.subr.bf16.mxu0 0
    %320 = vmatpush2.bf16.msra.mxu0 0
    %321 = vmatprep.subr.bf16.mxu0 0
    %322 = vmatpush2.bf16.msra.mxu0 0
    %323 = vmatprep.subr.bf16.mxu0 0
    %324 = vmatpush2.bf16.msra.mxu0 0
    %325 = vmatprep.mubr.bf16.mxu0 0
    %326 = vmatmul.mubr.bf16.gmra.mxu0 %v291
    %v327 = vpop.f32.mrf.mxu0
    %v328 = vadd.f32 %v42, %v327
    %v329 = vpop.f32.mrf.mxu0
    %v330 = vpop.f32.mrf.mxu0
    %v331 = vpop.f32.mrf.mxu0
    %332 = vdwg.mxu0
    %v333 = vadd.f32 %v38, %v328
    %v334 = vpack.c.bf16 %v333, %v333
    %v336 = vlaneseq
    %v337 = vshrl.u32 %v336, 7
    %v338 = vsub.s32 0, %v337
    %v339 = vrot.slane %v44, %v338
    %v340 = vlaneseq
    %v341 = vshrl.u32 %v340, 7
    %v342 = vsub.s32 1, %v341
    %v343 = vrot.slane %v44, %v342
    %v344 = vlaneseq
    %v345 = vshrl.u32 %v344, 7
    %v346 = vsub.s32 2, %v345
    %v347 = vrot.slane %v44, %v346
    %v348 = vlaneseq
    %v349 = vshrl.u32 %v348, 7
    %v350 = vsub.s32 3, %v349
    %v351 = vrot.slane %v44, %v350
    %v388 = vunpack.c.l.b16 %v56
    %v389 = vunpack.c.h.b16 %v56
    %v390 = vunpack.c.l.b16 %v57
    %v391 = vunpack.c.h.b16 %v57
    %v392 = vunpack.c.l.b16 %v58
    %v393 = vunpack.c.h.b16 %v58
    %v394 = vunpack.c.l.b16 %v59
    %v395 = vunpack.c.h.b16 %v59
    %v396 = vunpack.c.l.b16 %v60
    %v397 = vunpack.c.h.b16 %v60
    %v398 = vunpack.c.l.b16 %v61
    %v399 = vunpack.c.h.b16 %v61
    %v400 = vunpack.c.l.b16 %v62
    %v401 = vunpack.c.h.b16 %v62
    %v402 = vunpack.c.l.b16 %v63
    %v403 = vunpack.c.h.b16 %v63
    %v404 = vunpack.c.l.b16 %v64
    %v405 = vunpack.c.h.b16 %v64
    %v406 = vunpack.c.l.b16 %v65
    %v407 = vunpack.c.h.b16 %v65
    %v408 = vunpack.c.l.b16 %v66
    %v409 = vunpack.c.h.b16 %v66
    %v410 = vunpack.c.l.b16 %v67
    %v411 = vunpack.c.h.b16 %v67
    %v412 = vunpack.c.l.b16 %v68
    %v413 = vunpack.c.h.b16 %v68
    %v414 = vunpack.c.l.b16 %v69
    %v415 = vunpack.c.h.b16 %v69
    %v416 = vunpack.c.l.b16 %v70
    %v417 = vunpack.c.h.b16 %v70
    %v418 = vunpack.c.l.b16 %v71
    %v419 = vunpack.c.h.b16 %v71
    %v420 = vunpack.c.l.b16 %v72
    %v421 = vunpack.c.h.b16 %v72
    %v422 = vunpack.c.l.b16 %v73
    %v423 = vunpack.c.h.b16 %v73
    %v424 = vunpack.c.l.b16 %v74
    %v425 = vunpack.c.h.b16 %v74
    %v426 = vunpack.c.l.b16 %v75
    %v427 = vunpack.c.h.b16 %v75
    %v428 = vunpack.c.l.b16 %v76
    %v429 = vunpack.c.h.b16 %v76
    %v430 = vunpack.c.l.b16 %v77
    %v431 = vunpack.c.h.b16 %v77
    %v432 = vunpack.c.l.b16 %v78
    %v433 = vunpack.c.h.b16 %v78
    %v434 = vunpack.c.l.b16 %v79
    %v435 = vunpack.c.h.b16 %v79
    %v436 = vunpack.c.l.b16 %v80
    %v437 = vunpack.c.h.b16 %v80
    %v438 = vunpack.c.l.b16 %v81
    %v439 = vunpack.c.h.b16 %v81
    %v440 = vunpack.c.l.b16 %v82
    %v441 = vunpack.c.h.b16 %v82
    %v442 = vunpack.c.l.b16 %v83
    %v443 = vunpack.c.h.b16 %v83
    %v444 = vunpack.c.l.b16 %v84
    %v445 = vunpack.c.h.b16 %v84
    %v446 = vunpack.c.l.b16 %v85
    %v447 = vunpack.c.h.b16 %v85
    %v448 = vunpack.c.l.b16 %v86
    %v449 = vunpack.c.h.b16 %v86
    %v450 = vunpack.c.l.b16 %v87
    %v451 = vunpack.c.h.b16 %v87
    %v452 = vpack.c.b16 %v392, %v388
    %v453 = vpack.c.b16 %v393, %v389
    %v454 = vpack.c.b16 %v394, %v390
    %v455 = vpack.c.b16 %v395, %v391
    %v456 = vpack.c.b16 %v400, %v396
    %v457 = vpack.c.b16 %v401, %v397
    %v458 = vpack.c.b16 %v402, %v398
    %v459 = vpack.c.b16 %v403, %v399
    %v460 = vpack.c.b16 %v408, %v404
    %v461 = vpack.c.b16 %v409, %v405
    %v462 = vpack.c.b16 %v410, %v406
    %v463 = vpack.c.b16 %v411, %v407
    %v464 = vpack.c.b16 %v416, %v412
    %v465 = vpack.c.b16 %v417, %v413
    %v466 = vpack.c.b16 %v418, %v414
    %v467 = vpack.c.b16 %v419, %v415
    %v468 = vpack.c.b16 %v424, %v420
    %v469 = vpack.c.b16 %v425, %v421
    %v470 = vpack.c.b16 %v426, %v422
    %v471 = vpack.c.b16 %v427, %v423
    %v472 = vpack.c.b16 %v432, %v428
    %v473 = vpack.c.b16 %v433, %v429
    %v474 = vpack.c.b16 %v434, %v430
    %v475 = vpack.c.b16 %v435, %v431
    %v476 = vpack.c.b16 %v440, %v436
    %v477 = vpack.c.b16 %v441, %v437
    %v478 = vpack.c.b16 %v442, %v438
    %v479 = vpack.c.b16 %v443, %v439
    %v480 = vpack.c.b16 %v448, %v444
    %v481 = vpack.c.b16 %v449, %v445
    %v482 = vpack.c.b16 %v450, %v446
    %v483 = vpack.c.b16 %v451, %v447
    %516 = vmatprep.subr.bf16.mxu0 %v481
    %517 = vmatpush1.bf16.msra.mxu0 %v480
    %518 = vmatprep.subr.bf16.mxu0 %v477
    %519 = vmatpush1.bf16.msra.mxu0 %v476
    %520 = vmatprep.subr.bf16.mxu0 %v473
    %521 = vmatpush1.bf16.msra.mxu0 %v472
    %522 = vmatprep.subr.bf16.mxu0 %v469
    %523 = vmatpush1.bf16.msra.mxu0 %v468
    %524 = vmatprep.subr.bf16.mxu0 %v465
    %525 = vmatpush1.bf16.msra.mxu0 %v464
    %526 = vmatprep.subr.bf16.mxu0 %v461
    %527 = vmatpush1.bf16.msra.mxu0 %v460
    %528 = vmatprep.subr.bf16.mxu0 %v457
    %529 = vmatpush1.bf16.msra.mxu0 %v456
    %530 = vmatprep.subr.bf16.mxu0 %v453
    %531 = vmatpush1.bf16.msra.mxu0 %v452
    %532 = vmatprep.subr.bf16.mxu0 0
    %533 = vmatpush2.bf16.msra.mxu0 0
    %534 = vmatprep.subr.bf16.mxu0 0
    %535 = vmatpush2.bf16.msra.mxu0 0
    %536 = vmatprep.subr.bf16.mxu0 0
    %537 = vmatpush2.bf16.msra.mxu0 0
    %538 = vmatprep.subr.bf16.mxu0 0
    %539 = vmatpush2.bf16.msra.mxu0 0
    %540 = vmatprep.subr.bf16.mxu0 0
    %541 = vmatpush2.bf16.msra.mxu0 0
    %542 = vmatprep.subr.bf16.mxu0 0
    %543 = vmatpush2.bf16.msra.mxu0 0
    %544 = vmatprep.subr.bf16.mxu0 0
    %545 = vmatpush2.bf16.msra.mxu0 0
    %546 = vmatprep.subr.bf16.mxu0 0
    %547 = vmatpush2.bf16.msra.mxu0 0
    %548 = vmatprep.mubr.bf16.mxu0 0
    %549 = vmatmul.mubr.bf16.gmra.mxu0 %v334
    %v550 = vpop.f32.mrf.mxu0
    %v551 = vadd.f32 %v339, %v550
    %v552 = vpop.f32.mrf.mxu0
    %v553 = vadd.f32 %v343, %v552
    %v554 = vpop.f32.mrf.mxu0
    %v555 = vpop.f32.mrf.mxu0
    %556 = vdwg.mxu0
    %557 = vmatprep.subr.bf16.mxu0 %v483
    %558 = vmatpush1.bf16.msra.mxu0 %v482
    %559 = vmatprep.subr.bf16.mxu0 %v479
    %560 = vmatpush1.bf16.msra.mxu0 %v478
    %561 = vmatprep.subr.bf16.mxu0 %v475
    %562 = vmatpush1.bf16.msra.mxu0 %v474
    %563 = vmatprep.subr.bf16.mxu0 %v471
    %564 = vmatpush1.bf16.msra.mxu0 %v470
    %565 = vmatprep.subr.bf16.mxu0 %v467
    %566 = vmatpush1.bf16.msra.mxu0 %v466
    %567 = vmatprep.subr.bf16.mxu0 %v463
    %568 = vmatpush1.bf16.msra.mxu0 %v462
    %569 = vmatprep.subr.bf16.mxu0 %v459
    %570 = vmatpush1.bf16.msra.mxu0 %v458
    %571 = vmatprep.subr.bf16.mxu0 %v455
    %572 = vmatpush1.bf16.msra.mxu0 %v454
    %573 = vmatprep.subr.bf16.mxu0 0
    %574 = vmatpush2.bf16.msra.mxu0 0
    %575 = vmatprep.subr.bf16.mxu0 0
    %576 = vmatpush2.bf16.msra.mxu0 0
    %577 = vmatprep.subr.bf16.mxu0 0
    %578 = vmatpush2.bf16.msra.mxu0 0
    %579 = vmatprep.subr.bf16.mxu0 0
    %580 = vmatpush2.bf16.msra.mxu0 0
    %581 = vmatprep.subr.bf16.mxu0 0
    %582 = vmatpush2.bf16.msra.mxu0 0
    %583 = vmatprep.subr.bf16.mxu0 0
    %584 = vmatpush2.bf16.msra.mxu0 0
    %585 = vmatprep.subr.bf16.mxu0 0
    %586 = vmatpush2.bf16.msra.mxu0 0
    %587 = vmatprep.subr.bf16.mxu0 0
    %588 = vmatpush2.bf16.msra.mxu0 0
    %589 = vmatprep.mubr.bf16.mxu0 0
    %590 = vmatmul.mubr.bf16.gmra.mxu0 %v334
    %v591 = vpop.f32.mrf.mxu0
    %v592 = vadd.f32 %v347, %v591
    %v593 = vpop.f32.mrf.mxu0
    %v594 = vadd.f32 %v351, %v593
    %v595 = vpop.f32.mrf.mxu0
    %v596 = vpop.f32.mrf.mxu0
    %597 = vdwg.mxu0
    %v598 = vmax.f32 %v551, 0.0
    %v599 = vmax.f32 %v553, 0.0
    %v600 = vmax.f32 %v592, 0.0
    %v601 = vmax.f32 %v594, 0.0
    %v602 = vpack.c.bf16 %v598, %v598
    %v603 = vpack.c.bf16 %v599, %v599
    %v604 = vpack.c.bf16 %v600, %v600
    %v605 = vpack.c.bf16 %v601, %v601
    %v607 = vlaneseq
    %v608 = vshrl.u32 %v607, 7
    %v609 = vsub.s32 0, %v608
    %v610 = vrot.slane %v46, %v609
    %v611 = vlaneseq
    %v612 = vshrl.u32 %v611, 7
    %v613 = vsub.s32 1, %v612
    %v614 = vrot.slane %v46, %v613
    %v615 = vlaneseq
    %v616 = vshrl.u32 %v615, 7
    %v617 = vsub.s32 2, %v616
    %v618 = vrot.slane %v46, %v617
    %v619 = vlaneseq
    %v620 = vshrl.u32 %v619, 7
    %v621 = vsub.s32 3, %v620
    %v622 = vrot.slane %v46, %v621
    %v739 = vunpack.c.l.b16 %v88
    %v740 = vunpack.c.h.b16 %v88
    %v741 = vunpack.c.l.b16 %v89
    %v742 = vunpack.c.h.b16 %v89
    %v743 = vunpack.c.l.b16 %v90
    %v744 = vunpack.c.h.b16 %v90
    %v745 = vunpack.c.l.b16 %v91
    %v746 = vunpack.c.h.b16 %v91
    %v747 = vunpack.c.l.b16 %v92
    %v748 = vunpack.c.h.b16 %v92
    %v749 = vunpack.c.l.b16 %v93
    %v750 = vunpack.c.h.b16 %v93
    %v751 = vunpack.c.l.b16 %v94
    %v752 = vunpack.c.h.b16 %v94
    %v753 = vunpack.c.l.b16 %v95
    %v754 = vunpack.c.h.b16 %v95
    %v755 = vunpack.c.l.b16 %v96
    %v756 = vunpack.c.h.b16 %v96
    %v757 = vunpack.c.l.b16 %v97
    %v758 = vunpack.c.h.b16 %v97
    %v759 = vunpack.c.l.b16 %v98
    %v760 = vunpack.c.h.b16 %v98
    %v761 = vunpack.c.l.b16 %v99
    %v762 = vunpack.c.h.b16 %v99
    %v763 = vunpack.c.l.b16 %v100
    %v764 = vunpack.c.h.b16 %v100
    %v765 = vunpack.c.l.b16 %v101
    %v766 = vunpack.c.h.b16 %v101
    %v767 = vunpack.c.l.b16 %v102
    %v768 = vunpack.c.h.b16 %v102
    %v769 = vunpack.c.l.b16 %v103
    %v770 = vunpack.c.h.b16 %v103
    %v771 = vunpack.c.l.b16 %v104
    %v772 = vunpack.c.h.b16 %v104
    %v773 = vunpack.c.l.b16 %v105
    %v774 = vunpack.c.h.b16 %v105
    %v775 = vunpack.c.l.b16 %v106
    %v776 = vunpack.c.h.b16 %v106
    %v777 = vunpack.c.l.b16 %v107
    %v778 = vunpack.c.h.b16 %v107
    %v779 = vunpack.c.l.b16 %v108
    %v780 = vunpack.c.h.b16 %v108
    %v781 = vunpack.c.l.b16 %v109
    %v782 = vunpack.c.h.b16 %v109
    %v783 = vunpack.c.l.b16 %v110
    %v784 = vunpack.c.h.b16 %v110
    %v785 = vunpack.c.l.b16 %v111
    %v786 = vunpack.c.h.b16 %v111
    %v787 = vunpack.c.l.b16 %v112
    %v788 = vunpack.c.h.b16 %v112
    %v789 = vunpack.c.l.b16 %v113
    %v790 = vunpack.c.h.b16 %v113
    %v791 = vunpack.c.l.b16 %v114
    %v792 = vunpack.c.h.b16 %v114
    %v793 = vunpack.c.l.b16 %v115
    %v794 = vunpack.c.h.b16 %v115
    %v795 = vunpack.c.l.b16 %v116
    %v796 = vunpack.c.h.b16 %v116
    %v797 = vunpack.c.l.b16 %v117
    %v798 = vunpack.c.h.b16 %v117
    %v799 = vunpack.c.l.b16 %v118
    %v800 = vunpack.c.h.b16 %v118
    %v801 = vunpack.c.l.b16 %v119
    %v802 = vunpack.c.h.b16 %v119
    %v803 = vunpack.c.l.b16 %v120
    %v804 = vunpack.c.h.b16 %v120
    %v805 = vunpack.c.l.b16 %v121
    %v806 = vunpack.c.h.b16 %v121
    %v807 = vunpack.c.l.b16 %v122
    %v808 = vunpack.c.h.b16 %v122
    %v809 = vunpack.c.l.b16 %v123
    %v810 = vunpack.c.h.b16 %v123
    %v811 = vunpack.c.l.b16 %v124
    %v812 = vunpack.c.h.b16 %v124
    %v813 = vunpack.c.l.b16 %v125
    %v814 = vunpack.c.h.b16 %v125
    %v815 = vunpack.c.l.b16 %v126
    %v816 = vunpack.c.h.b16 %v126
    %v817 = vunpack.c.l.b16 %v127
    %v818 = vunpack.c.h.b16 %v127
    %v819 = vunpack.c.l.b16 %v128
    %v820 = vunpack.c.h.b16 %v128
    %v821 = vunpack.c.l.b16 %v129
    %v822 = vunpack.c.h.b16 %v129
    %v823 = vunpack.c.l.b16 %v130
    %v824 = vunpack.c.h.b16 %v130
    %v825 = vunpack.c.l.b16 %v131
    %v826 = vunpack.c.h.b16 %v131
    %v827 = vunpack.c.l.b16 %v132
    %v828 = vunpack.c.h.b16 %v132
    %v829 = vunpack.c.l.b16 %v133
    %v830 = vunpack.c.h.b16 %v133
    %v831 = vunpack.c.l.b16 %v134
    %v832 = vunpack.c.h.b16 %v134
    %v833 = vunpack.c.l.b16 %v135
    %v834 = vunpack.c.h.b16 %v135
    %v835 = vunpack.c.l.b16 %v136
    %v836 = vunpack.c.h.b16 %v136
    %v837 = vunpack.c.l.b16 %v137
    %v838 = vunpack.c.h.b16 %v137
    %v839 = vunpack.c.l.b16 %v138
    %v840 = vunpack.c.h.b16 %v138
    %v841 = vunpack.c.l.b16 %v139
    %v842 = vunpack.c.h.b16 %v139
    %v843 = vunpack.c.l.b16 %v140
    %v844 = vunpack.c.h.b16 %v140
    %v845 = vunpack.c.l.b16 %v141
    %v846 = vunpack.c.h.b16 %v141
    %v847 = vunpack.c.l.b16 %v142
    %v848 = vunpack.c.h.b16 %v142
    %v849 = vunpack.c.l.b16 %v143
    %v850 = vunpack.c.h.b16 %v143
    %v851 = vunpack.c.l.b16 %v144
    %v852 = vunpack.c.h.b16 %v144
    %v853 = vunpack.c.l.b16 %v145
    %v854 = vunpack.c.h.b16 %v145
    %v855 = vunpack.c.l.b16 %v146
    %v856 = vunpack.c.h.b16 %v146
    %v857 = vunpack.c.l.b16 %v147
    %v858 = vunpack.c.h.b16 %v147
    %v859 = vunpack.c.l.b16 %v148
    %v860 = vunpack.c.h.b16 %v148
    %v861 = vunpack.c.l.b16 %v149
    %v862 = vunpack.c.h.b16 %v149
    %v863 = vunpack.c.l.b16 %v150
    %v864 = vunpack.c.h.b16 %v150
    %v865 = vunpack.c.l.b16 %v151
    %v866 = vunpack.c.h.b16 %v151
    %v867 = vunpack.c.l.b16 %v152
    %v868 = vunpack.c.h.b16 %v152
    %v869 = vunpack.c.l.b16 %v153
    %v870 = vunpack.c.h.b16 %v153
    %v871 = vunpack.c.l.b16 %v154
    %v872 = vunpack.c.h.b16 %v154
    %v873 = vunpack.c.l.b16 %v155
    %v874 = vunpack.c.h.b16 %v155
    %v875 = vunpack.c.l.b16 %v156
    %v876 = vunpack.c.h.b16 %v156
    %v877 = vunpack.c.l.b16 %v157
    %v878 = vunpack.c.h.b16 %v157
    %v879 = vunpack.c.l.b16 %v158
    %v880 = vunpack.c.h.b16 %v158
    %v881 = vunpack.c.l.b16 %v159
    %v882 = vunpack.c.h.b16 %v159
    %v883 = vunpack.c.l.b16 %v160
    %v884 = vunpack.c.h.b16 %v160
    %v885 = vunpack.c.l.b16 %v161
    %v886 = vunpack.c.h.b16 %v161
    %v887 = vunpack.c.l.b16 %v162
    %v888 = vunpack.c.h.b16 %v162
    %v889 = vunpack.c.l.b16 %v163
    %v890 = vunpack.c.h.b16 %v163
    %v891 = vunpack.c.l.b16 %v164
    %v892 = vunpack.c.h.b16 %v164
    %v893 = vunpack.c.l.b16 %v165
    %v894 = vunpack.c.h.b16 %v165
    %v895 = vunpack.c.l.b16 %v166
    %v896 = vunpack.c.h.b16 %v166
    %v897 = vunpack.c.l.b16 %v167
    %v898 = vunpack.c.h.b16 %v167
    %v899 = vunpack.c.l.b16 %v168
    %v900 = vunpack.c.h.b16 %v168
    %v901 = vunpack.c.l.b16 %v169
    %v902 = vunpack.c.h.b16 %v169
    %v903 = vunpack.c.l.b16 %v170
    %v904 = vunpack.c.h.b16 %v170
    %v905 = vunpack.c.l.b16 %v171
    %v906 = vunpack.c.h.b16 %v171
    %v907 = vunpack.c.l.b16 %v172
    %v908 = vunpack.c.h.b16 %v172
    %v909 = vunpack.c.l.b16 %v173
    %v910 = vunpack.c.h.b16 %v173
    %v911 = vunpack.c.l.b16 %v174
    %v912 = vunpack.c.h.b16 %v174
    %v913 = vunpack.c.l.b16 %v175
    %v914 = vunpack.c.h.b16 %v175
    %v915 = vunpack.c.l.b16 %v176
    %v916 = vunpack.c.h.b16 %v176
    %v917 = vunpack.c.l.b16 %v177
    %v918 = vunpack.c.h.b16 %v177
    %v919 = vunpack.c.l.b16 %v178
    %v920 = vunpack.c.h.b16 %v178
    %v921 = vunpack.c.l.b16 %v179
    %v922 = vunpack.c.h.b16 %v179
    %v923 = vunpack.c.l.b16 %v180
    %v924 = vunpack.c.h.b16 %v180
    %v925 = vunpack.c.l.b16 %v181
    %v926 = vunpack.c.h.b16 %v181
    %v927 = vunpack.c.l.b16 %v182
    %v928 = vunpack.c.h.b16 %v182
    %v929 = vunpack.c.l.b16 %v183
    %v930 = vunpack.c.h.b16 %v183
    %v931 = vunpack.c.l.b16 %v184
    %v932 = vunpack.c.h.b16 %v184
    %v933 = vunpack.c.l.b16 %v185
    %v934 = vunpack.c.h.b16 %v185
    %v935 = vunpack.c.l.b16 %v186
    %v936 = vunpack.c.h.b16 %v186
    %v937 = vunpack.c.l.b16 %v187
    %v938 = vunpack.c.h.b16 %v187
    %v939 = vunpack.c.l.b16 %v188
    %v940 = vunpack.c.h.b16 %v188
    %v941 = vunpack.c.l.b16 %v189
    %v942 = vunpack.c.h.b16 %v189
    %v943 = vunpack.c.l.b16 %v190
    %v944 = vunpack.c.h.b16 %v190
    %v945 = vunpack.c.l.b16 %v191
    %v946 = vunpack.c.h.b16 %v191
    %v947 = vunpack.c.l.b16 %v192
    %v948 = vunpack.c.h.b16 %v192
    %v949 = vunpack.c.l.b16 %v193
    %v950 = vunpack.c.h.b16 %v193
    %v951 = vunpack.c.l.b16 %v194
    %v952 = vunpack.c.h.b16 %v194
    %v953 = vunpack.c.l.b16 %v195
    %v954 = vunpack.c.h.b16 %v195
    %v955 = vunpack.c.l.b16 %v196
    %v956 = vunpack.c.h.b16 %v196
    %v957 = vunpack.c.l.b16 %v197
    %v958 = vunpack.c.h.b16 %v197
    %v959 = vunpack.c.l.b16 %v198
    %v960 = vunpack.c.h.b16 %v198
    %v961 = vunpack.c.l.b16 %v199
    %v962 = vunpack.c.h.b16 %v199
    %v963 = vpack.c.b16 %v743, %v739
    %v964 = vpack.c.b16 %v744, %v740
    %v965 = vpack.c.b16 %v745, %v741
    %v966 = vpack.c.b16 %v746, %v742
    %v967 = vpack.c.b16 %v751, %v747
    %v968 = vpack.c.b16 %v752, %v748
    %v969 = vpack.c.b16 %v753, %v749
    %v970 = vpack.c.b16 %v754, %v750
    %v971 = vpack.c.b16 %v759, %v755
    %v972 = vpack.c.b16 %v760, %v756
    %v973 = vpack.c.b16 %v761, %v757
    %v974 = vpack.c.b16 %v762, %v758
    %v975 = vpack.c.b16 %v767, %v763
    %v976 = vpack.c.b16 %v768, %v764
    %v977 = vpack.c.b16 %v769, %v765
    %v978 = vpack.c.b16 %v770, %v766
    %v979 = vpack.c.b16 %v775, %v771
    %v980 = vpack.c.b16 %v776, %v772
    %v981 = vpack.c.b16 %v777, %v773
    %v982 = vpack.c.b16 %v778, %v774
    %v983 = vpack.c.b16 %v783, %v779
    %v984 = vpack.c.b16 %v784, %v780
    %v985 = vpack.c.b16 %v785, %v781
    %v986 = vpack.c.b16 %v786, %v782
    %v987 = vpack.c.b16 %v791, %v787
    %v988 = vpack.c.b16 %v792, %v788
    %v989 = vpack.c.b16 %v793, %v789
    %v990 = vpack.c.b16 %v794, %v790
    %v991 = vpack.c.b16 %v799, %v795
    %v992 = vpack.c.b16 %v800, %v796
    %v993 = vpack.c.b16 %v801, %v797
    %v994 = vpack.c.b16 %v802, %v798
    %v995 = vpack.c.b16 %v807, %v803
    %v996 = vpack.c.b16 %v808, %v804
    %v997 = vpack.c.b16 %v809, %v805
    %v998 = vpack.c.b16 %v810, %v806
    %v999 = vpack.c.b16 %v815, %v811
    %v1000 = vpack.c.b16 %v816, %v812
    %v1001 = vpack.c.b16 %v817, %v813
    %v1002 = vpack.c.b16 %v818, %v814
    %v1003 = vpack.c.b16 %v823, %v819
    %v1004 = vpack.c.b16 %v824, %v820
    %v1005 = vpack.c.b16 %v825, %v821
    %v1006 = vpack.c.b16 %v826, %v822
    %v1007 = vpack.c.b16 %v831, %v827
    %v1008 = vpack.c.b16 %v832, %v828
    %v1009 = vpack.c.b16 %v833, %v829
    %v1010 = vpack.c.b16 %v834, %v830
    %v1011 = vpack.c.b16 %v839, %v835
    %v1012 = vpack.c.b16 %v840, %v836
    %v1013 = vpack.c.b16 %v841, %v837
    %v1014 = vpack.c.b16 %v842, %v838
    %v1015 = vpack.c.b16 %v847, %v843
    %v1016 = vpack.c.b16 %v848, %v844
    %v1017 = vpack.c.b16 %v849, %v845
    %v1018 = vpack.c.b16 %v850, %v846
    %v1019 = vpack.c.b16 %v855, %v851
    %v1020 = vpack.c.b16 %v856, %v852
    %v1021 = vpack.c.b16 %v857, %v853
    %v1022 = vpack.c.b16 %v858, %v854
    %v1023 = vpack.c.b16 %v863, %v859
    %v1024 = vpack.c.b16 %v864, %v860
    %v1025 = vpack.c.b16 %v865, %v861
    %v1026 = vpack.c.b16 %v866, %v862
    %v1027 = vpack.c.b16 %v871, %v867
    %v1028 = vpack.c.b16 %v872, %v868
    %v1029 = vpack.c.b16 %v873, %v869
    %v1030 = vpack.c.b16 %v874, %v870
    %v1031 = vpack.c.b16 %v879, %v875
    %v1032 = vpack.c.b16 %v880, %v876
    %v1033 = vpack.c.b16 %v881, %v877
    %v1034 = vpack.c.b16 %v882, %v878
    %v1035 = vpack.c.b16 %v887, %v883
    %v1036 = vpack.c.b16 %v888, %v884
    %v1037 = vpack.c.b16 %v889, %v885
    %v1038 = vpack.c.b16 %v890, %v886
    %v1039 = vpack.c.b16 %v895, %v891
    %v1040 = vpack.c.b16 %v896, %v892
    %v1041 = vpack.c.b16 %v897, %v893
    %v1042 = vpack.c.b16 %v898, %v894
    %v1043 = vpack.c.b16 %v903, %v899
    %v1044 = vpack.c.b16 %v904, %v900
    %v1045 = vpack.c.b16 %v905, %v901
    %v1046 = vpack.c.b16 %v906, %v902
    %v1047 = vpack.c.b16 %v911, %v907
    %v1048 = vpack.c.b16 %v912, %v908
    %v1049 = vpack.c.b16 %v913, %v909
    %v1050 = vpack.c.b16 %v914, %v910
    %v1051 = vpack.c.b16 %v919, %v915
    %v1052 = vpack.c.b16 %v920, %v916
    %v1053 = vpack.c.b16 %v921, %v917
    %v1054 = vpack.c.b16 %v922, %v918
    %v1055 = vpack.c.b16 %v927, %v923
    %v1056 = vpack.c.b16 %v928, %v924
    %v1057 = vpack.c.b16 %v929, %v925
    %v1058 = vpack.c.b16 %v930, %v926
    %v1059 = vpack.c.b16 %v935, %v931
    %v1060 = vpack.c.b16 %v936, %v932
    %v1061 = vpack.c.b16 %v937, %v933
    %v1062 = vpack.c.b16 %v938, %v934
    %v1063 = vpack.c.b16 %v943, %v939
    %v1064 = vpack.c.b16 %v944, %v940
    %v1065 = vpack.c.b16 %v945, %v941
    %v1066 = vpack.c.b16 %v946, %v942
    %v1067 = vpack.c.b16 %v951, %v947
    %v1068 = vpack.c.b16 %v952, %v948
    %v1069 = vpack.c.b16 %v953, %v949
    %v1070 = vpack.c.b16 %v954, %v950
    %v1071 = vpack.c.b16 %v959, %v955
    %v1072 = vpack.c.b16 %v960, %v956
    %v1073 = vpack.c.b16 %v961, %v957
    %v1074 = vpack.c.b16 %v962, %v958
    %v1188 = vsel %vm289, %v605, 0
    %1190 = vmatprep.subr.bf16.mxu0 %v992
    %1191 = vmatpush1.bf16.msra.mxu0 %v991
    %1192 = vmatprep.subr.bf16.mxu0 %v988
    %1193 = vmatpush1.bf16.msra.mxu0 %v987
    %1194 = vmatprep.subr.bf16.mxu0 %v984
    %1195 = vmatpush1.bf16.msra.mxu0 %v983
    %1196 = vmatprep.subr.bf16.mxu0 %v980
    %1197 = vmatpush1.bf16.msra.mxu0 %v979
    %1198 = vmatprep.subr.bf16.mxu0 %v976
    %1199 = vmatpush1.bf16.msra.mxu0 %v975
    %1200 = vmatprep.subr.bf16.mxu0 %v972
    %1201 = vmatpush1.bf16.msra.mxu0 %v971
    %1202 = vmatprep.subr.bf16.mxu0 %v968
    %1203 = vmatpush1.bf16.msra.mxu0 %v967
    %1204 = vmatprep.subr.bf16.mxu0 %v964
    %1205 = vmatpush1.bf16.msra.mxu0 %v963
    %1206 = vmatprep.subr.bf16.mxu0 %v1024
    %1207 = vmatpush2.bf16.msra.mxu0 %v1023
    %1208 = vmatprep.subr.bf16.mxu0 %v1020
    %1209 = vmatpush2.bf16.msra.mxu0 %v1019
    %1210 = vmatprep.subr.bf16.mxu0 %v1016
    %1211 = vmatpush2.bf16.msra.mxu0 %v1015
    %1212 = vmatprep.subr.bf16.mxu0 %v1012
    %1213 = vmatpush2.bf16.msra.mxu0 %v1011
    %1214 = vmatprep.subr.bf16.mxu0 %v1008
    %1215 = vmatpush2.bf16.msra.mxu0 %v1007
    %1216 = vmatprep.subr.bf16.mxu0 %v1004
    %1217 = vmatpush2.bf16.msra.mxu0 %v1003
    %1218 = vmatprep.subr.bf16.mxu0 %v1000
    %1219 = vmatpush2.bf16.msra.mxu0 %v999
    %1220 = vmatprep.subr.bf16.mxu0 %v996
    %1221 = vmatpush2.bf16.msra.mxu0 %v995
    %1222 = vmatprep.mubr.bf16.mxu0 %v603
    %1223 = vmatmul.mubr.bf16.gmra.mxu0 %v602
    %v1224 = vpop.f32.mrf.mxu0
    %v1225 = vadd.f32 %v610, %v1224
    %v1226 = vpop.f32.mrf.mxu0
    %v1227 = vadd.f32 %v614, %v1226
    %v1228 = vpop.f32.mrf.mxu0
    %v1229 = vpop.f32.mrf.mxu0
    %1230 = vdwg.mxu0
    %1231 = vmatprep.subr.bf16.mxu0 %v1056
    %1232 = vmatpush1.bf16.msra.mxu0 %v1055
    %1233 = vmatprep.subr.bf16.mxu0 %v1052
    %1234 = vmatpush1.bf16.msra.mxu0 %v1051
    %1235 = vmatprep.subr.bf16.mxu0 %v1048
    %1236 = vmatpush1.bf16.msra.mxu0 %v1047
    %1237 = vmatprep.subr.bf16.mxu0 %v1044
    %1238 = vmatpush1.bf16.msra.mxu0 %v1043
    %1239 = vmatprep.subr.bf16.mxu0 %v1040
    %1240 = vmatpush1.bf16.msra.mxu0 %v1039
    %1241 = vmatprep.subr.bf16.mxu0 %v1036
    %1242 = vmatpush1.bf16.msra.mxu0 %v1035
    %1243 = vmatprep.subr.bf16.mxu0 %v1032
    %1244 = vmatpush1.bf16.msra.mxu0 %v1031
    %1245 = vmatprep.subr.bf16.mxu0 %v1028
    %1246 = vmatpush1.bf16.msra.mxu0 %v1027
    %1247 = vmatprep.subr.bf16.mxu0 0
    %1248 = vmatpush2.bf16.msra.mxu0 0
    %1249 = vmatprep.subr.bf16.mxu0 0
    %1250 = vmatpush2.bf16.msra.mxu0 0
    %1251 = vmatprep.subr.bf16.mxu0 0
    %1252 = vmatpush2.bf16.msra.mxu0 0
    %1253 = vmatprep.subr.bf16.mxu0 0
    %1254 = vmatpush2.bf16.msra.mxu0 0
    %1255 = vmatprep.subr.bf16.mxu0 %v1072
    %1256 = vmatpush2.bf16.msra.mxu0 %v1071
    %1257 = vmatprep.subr.bf16.mxu0 %v1068
    %1258 = vmatpush2.bf16.msra.mxu0 %v1067
    %1259 = vmatprep.subr.bf16.mxu0 %v1064
    %1260 = vmatpush2.bf16.msra.mxu0 %v1063
    %1261 = vmatprep.subr.bf16.mxu0 %v1060
    %1262 = vmatpush2.bf16.msra.mxu0 %v1059
    %1263 = vmatprep.mubr.bf16.mxu0 %v1188
    %1264 = vmatmul.mubr.bf16.gmra.mxu0 %v604
    %v1265 = vpop.f32.mrf.mxu0
    %v1266 = vadd.f32 %v1225, %v1265
    %v1267 = vpop.f32.mrf.mxu0
    %v1268 = vadd.f32 %v1227, %v1267
    %v1269 = vpop.f32.mrf.mxu0
    %v1270 = vpop.f32.mrf.mxu0
    %1271 = vdwg.mxu0
    %1272 = vmatprep.subr.bf16.mxu0 %v994
    %1273 = vmatpush1.bf16.msra.mxu0 %v993
    %1274 = vmatprep.subr.bf16.mxu0 %v990
    %1275 = vmatpush1.bf16.msra.mxu0 %v989
    %1276 = vmatprep.subr.bf16.mxu0 %v986
    %1277 = vmatpush1.bf16.msra.mxu0 %v985
    %1278 = vmatprep.subr.bf16.mxu0 %v982
    %1279 = vmatpush1.bf16.msra.mxu0 %v981
    %1280 = vmatprep.subr.bf16.mxu0 %v978
    %1281 = vmatpush1.bf16.msra.mxu0 %v977
    %1282 = vmatprep.subr.bf16.mxu0 %v974
    %1283 = vmatpush1.bf16.msra.mxu0 %v973
    %1284 = vmatprep.subr.bf16.mxu0 %v970
    %1285 = vmatpush1.bf16.msra.mxu0 %v969
    %1286 = vmatprep.subr.bf16.mxu0 %v966
    %1287 = vmatpush1.bf16.msra.mxu0 %v965
    %1288 = vmatprep.subr.bf16.mxu0 %v1026
    %1289 = vmatpush2.bf16.msra.mxu0 %v1025
    %1290 = vmatprep.subr.bf16.mxu0 %v1022
    %1291 = vmatpush2.bf16.msra.mxu0 %v1021
    %1292 = vmatprep.subr.bf16.mxu0 %v1018
    %1293 = vmatpush2.bf16.msra.mxu0 %v1017
    %1294 = vmatprep.subr.bf16.mxu0 %v1014
    %1295 = vmatpush2.bf16.msra.mxu0 %v1013
    %1296 = vmatprep.subr.bf16.mxu0 %v1010
    %1297 = vmatpush2.bf16.msra.mxu0 %v1009
    %1298 = vmatprep.subr.bf16.mxu0 %v1006
    %1299 = vmatpush2.bf16.msra.mxu0 %v1005
    %1300 = vmatprep.subr.bf16.mxu0 %v1002
    %1301 = vmatpush2.bf16.msra.mxu0 %v1001
    %1302 = vmatprep.subr.bf16.mxu0 %v998
    %1303 = vmatpush2.bf16.msra.mxu0 %v997
    %1304 = vmatprep.mubr.bf16.mxu0 %v603
    %1305 = vmatmul.mubr.bf16.gmra.mxu0 %v602
    %v1306 = vpop.f32.mrf.mxu0
    %v1307 = vadd.f32 %v618, %v1306
    %v1308 = vpop.f32.mrf.mxu0
    %v1309 = vadd.f32 %v622, %v1308
    %v1310 = vpop.f32.mrf.mxu0
    %v1311 = vpop.f32.mrf.mxu0
    %1312 = vdwg.mxu0
    %1313 = vmatprep.subr.bf16.mxu0 %v1058
    %1314 = vmatpush1.bf16.msra.mxu0 %v1057
    %1315 = vmatprep.subr.bf16.mxu0 %v1054
    %1316 = vmatpush1.bf16.msra.mxu0 %v1053
    %1317 = vmatprep.subr.bf16.mxu0 %v1050
    %1318 = vmatpush1.bf16.msra.mxu0 %v1049
    %1319 = vmatprep.subr.bf16.mxu0 %v1046
    %1320 = vmatpush1.bf16.msra.mxu0 %v1045
    %1321 = vmatprep.subr.bf16.mxu0 %v1042
    %1322 = vmatpush1.bf16.msra.mxu0 %v1041
    %1323 = vmatprep.subr.bf16.mxu0 %v1038
    %1324 = vmatpush1.bf16.msra.mxu0 %v1037
    %1325 = vmatprep.subr.bf16.mxu0 %v1034
    %1326 = vmatpush1.bf16.msra.mxu0 %v1033
    %1327 = vmatprep.subr.bf16.mxu0 %v1030
    %1328 = vmatpush1.bf16.msra.mxu0 %v1029
    %1329 = vmatprep.subr.bf16.mxu0 0
    %1330 = vmatpush2.bf16.msra.mxu0 0
    %1331 = vmatprep.subr.bf16.mxu0 0
    %1332 = vmatpush2.bf16.msra.mxu0 0
    %1333 = vmatprep.subr.bf16.mxu0 0
    %1334 = vmatpush2.bf16.msra.mxu0 0
    %1335 = vmatprep.subr.bf16.mxu0 0
    %1336 = vmatpush2.bf16.msra.mxu0 0
    %1337 = vmatprep.subr.bf16.mxu0 %v1074
    %1338 = vmatpush2.bf16.msra.mxu0 %v1073
    %1339 = vmatprep.subr.bf16.mxu0 %v1070
    %1340 = vmatpush2.bf16.msra.mxu0 %v1069
    %1341 = vmatprep.subr.bf16.mxu0 %v1066
    %1342 = vmatpush2.bf16.msra.mxu0 %v1065
    %1343 = vmatprep.subr.bf16.mxu0 %v1062
    %1344 = vmatpush2.bf16.msra.mxu0 %v1061
    %1345 = vmatprep.mubr.bf16.mxu0 %v1188
    %1346 = vmatmul.mubr.bf16.gmra.mxu0 %v604
    %v1347 = vpop.f32.mrf.mxu0
    %v1348 = vadd.f32 %v1307, %v1347
    %v1349 = vpop.f32.mrf.mxu0
    %v1350 = vadd.f32 %v1309, %v1349
    %v1351 = vpop.f32.mrf.mxu0
    %v1352 = vpop.f32.mrf.mxu0
    %1353 = vdwg.mxu0
    %v1354 = vmax.f32 %v1266, 0.0
    %v1355 = vmax.f32 %v1268, 0.0
    %v1356 = vmax.f32 %v1348, 0.0
    %v1357 = vmax.f32 %v1350, 0.0
    %v1358 = vpack.c.bf16 %v1354, %v1354
    %v1359 = vpack.c.bf16 %v1355, %v1355
    %v1360 = vpack.c.bf16 %v1356, %v1356
    %v1361 = vpack.c.bf16 %v1357, %v1357
    %v1418 = vunpack.c.l.b16 %v200
    %v1419 = vunpack.c.l.b16 %v201
    %v1420 = vunpack.c.l.b16 %v202
    %v1421 = vunpack.c.l.b16 %v203
    %v1422 = vunpack.c.l.b16 %v204
    %v1423 = vunpack.c.l.b16 %v205
    %v1424 = vunpack.c.l.b16 %v206
    %v1425 = vunpack.c.l.b16 %v207
    %v1426 = vunpack.c.l.b16 %v208
    %v1427 = vunpack.c.l.b16 %v209
    %v1428 = vunpack.c.l.b16 %v210
    %v1429 = vunpack.c.l.b16 %v211
    %v1430 = vunpack.c.l.b16 %v212
    %v1431 = vunpack.c.l.b16 %v213
    %v1432 = vunpack.c.l.b16 %v214
    %v1433 = vunpack.c.l.b16 %v215
    %v1434 = vunpack.c.l.b16 %v216
    %v1435 = vunpack.c.l.b16 %v217
    %v1436 = vunpack.c.l.b16 %v218
    %v1437 = vunpack.c.l.b16 %v219
    %v1438 = vunpack.c.l.b16 %v220
    %v1439 = vunpack.c.l.b16 %v221
    %v1440 = vunpack.c.l.b16 %v222
    %v1441 = vunpack.c.l.b16 %v223
    %v1442 = vunpack.c.l.b16 %v224
    %v1443 = vunpack.c.l.b16 %v225
    %v1444 = vunpack.c.l.b16 %v226
    %v1445 = vunpack.c.l.b16 %v227
    %v1446 = vunpack.c.l.b16 %v228
    %v1447 = vunpack.c.l.b16 %v229
    %v1448 = vunpack.c.l.b16 %v230
    %v1449 = vunpack.c.l.b16 %v231
    %v1450 = vunpack.c.l.b16 %v232
    %v1451 = vunpack.c.l.b16 %v233
    %v1452 = vunpack.c.l.b16 %v234
    %v1453 = vunpack.c.l.b16 %v235
    %v1454 = vunpack.c.l.b16 %v236
    %v1455 = vunpack.c.l.b16 %v237
    %v1456 = vunpack.c.l.b16 %v238
    %v1457 = vunpack.c.l.b16 %v239
    %v1458 = vunpack.c.l.b16 %v240
    %v1459 = vunpack.c.l.b16 %v241
    %v1460 = vunpack.c.l.b16 %v242
    %v1461 = vunpack.c.l.b16 %v243
    %v1462 = vunpack.c.l.b16 %v244
    %v1463 = vunpack.c.l.b16 %v245
    %v1464 = vunpack.c.l.b16 %v246
    %v1465 = vunpack.c.l.b16 %v247
    %v1466 = vunpack.c.l.b16 %v248
    %v1467 = vunpack.c.l.b16 %v249
    %v1468 = vunpack.c.l.b16 %v250
    %v1469 = vunpack.c.l.b16 %v251
    %v1470 = vunpack.c.l.b16 %v252
    %v1471 = vunpack.c.l.b16 %v253
    %v1472 = vunpack.c.l.b16 %v254
    %v1473 = vunpack.c.l.b16 %v255
    %v1474 = vpack.c.b16 %v1419, %v1418
    %v1475 = vpack.c.b16 %v1421, %v1420
    %v1476 = vpack.c.b16 %v1423, %v1422
    %v1477 = vpack.c.b16 %v1425, %v1424
    %v1478 = vpack.c.b16 %v1427, %v1426
    %v1479 = vpack.c.b16 %v1429, %v1428
    %v1480 = vpack.c.b16 %v1431, %v1430
    %v1481 = vpack.c.b16 %v1433, %v1432
    %v1482 = vpack.c.b16 %v1435, %v1434
    %v1483 = vpack.c.b16 %v1437, %v1436
    %v1484 = vpack.c.b16 %v1439, %v1438
    %v1485 = vpack.c.b16 %v1441, %v1440
    %v1486 = vpack.c.b16 %v1443, %v1442
    %v1487 = vpack.c.b16 %v1445, %v1444
    %v1488 = vpack.c.b16 %v1447, %v1446
    %v1489 = vpack.c.b16 %v1449, %v1448
    %v1490 = vpack.c.b16 %v1451, %v1450
    %v1491 = vpack.c.b16 %v1453, %v1452
    %v1492 = vpack.c.b16 %v1455, %v1454
    %v1493 = vpack.c.b16 %v1457, %v1456
    %v1494 = vpack.c.b16 %v1459, %v1458
    %v1495 = vpack.c.b16 %v1461, %v1460
    %v1496 = vpack.c.b16 %v1463, %v1462
    %v1497 = vpack.c.b16 %v1465, %v1464
    %v1498 = vpack.c.b16 %v1467, %v1466
    %v1499 = vpack.c.b16 %v1469, %v1468
    %v1500 = vpack.c.b16 %v1471, %v1470
    %v1501 = vpack.c.b16 %v1473, %v1472
    %v1531 = vsel %vm289, %v1361, 0
    %1533 = vmatprep.subr.bf16.mxu0 0
    %1534 = vmatpush1.bf16.msra.mxu0 %v1481
    %1535 = vmatprep.subr.bf16.mxu0 0
    %1536 = vmatpush1.bf16.msra.mxu0 %v1480
    %1537 = vmatprep.subr.bf16.mxu0 0
    %1538 = vmatpush1.bf16.msra.mxu0 %v1479
    %1539 = vmatprep.subr.bf16.mxu0 0
    %1540 = vmatpush1.bf16.msra.mxu0 %v1478
    %1541 = vmatprep.subr.bf16.mxu0 0
    %1542 = vmatpush1.bf16.msra.mxu0 %v1477
    %1543 = vmatprep.subr.bf16.mxu0 0
    %1544 = vmatpush1.bf16.msra.mxu0 %v1476
    %1545 = vmatprep.subr.bf16.mxu0 0
    %1546 = vmatpush1.bf16.msra.mxu0 %v1475
    %1547 = vmatprep.subr.bf16.mxu0 0
    %1548 = vmatpush1.bf16.msra.mxu0 %v1474
    %1549 = vmatprep.subr.bf16.mxu0 0
    %1550 = vmatpush2.bf16.msra.mxu0 %v1489
    %1551 = vmatprep.subr.bf16.mxu0 0
    %1552 = vmatpush2.bf16.msra.mxu0 %v1488
    %1553 = vmatprep.subr.bf16.mxu0 0
    %1554 = vmatpush2.bf16.msra.mxu0 %v1487
    %1555 = vmatprep.subr.bf16.mxu0 0
    %1556 = vmatpush2.bf16.msra.mxu0 %v1486
    %1557 = vmatprep.subr.bf16.mxu0 0
    %1558 = vmatpush2.bf16.msra.mxu0 %v1485
    %1559 = vmatprep.subr.bf16.mxu0 0
    %1560 = vmatpush2.bf16.msra.mxu0 %v1484
    %1561 = vmatprep.subr.bf16.mxu0 0
    %1562 = vmatpush2.bf16.msra.mxu0 %v1483
    %1563 = vmatprep.subr.bf16.mxu0 0
    %1564 = vmatpush2.bf16.msra.mxu0 %v1482
    %1565 = vmatprep.mubr.bf16.mxu0 %v1359
    %1566 = vmatmul.mubr.bf16.gmra.mxu0 %v1358
    %v1567 = vpop.f32.mrf.mxu0
    %v1568 = vadd.f32 %v47, %v1567
    %v1569 = vpop.f32.mrf.mxu0
    %v1570 = vpop.f32.mrf.mxu0
    %v1571 = vpop.f32.mrf.mxu0
    %1572 = vdwg.mxu0
    %1573 = vmatprep.subr.bf16.mxu0 0
    %1574 = vmatpush1.bf16.msra.mxu0 %v1497
    %1575 = vmatprep.subr.bf16.mxu0 0
    %1576 = vmatpush1.bf16.msra.mxu0 %v1496
    %1577 = vmatprep.subr.bf16.mxu0 0
    %1578 = vmatpush1.bf16.msra.mxu0 %v1495
    %1579 = vmatprep.subr.bf16.mxu0 0
    %1580 = vmatpush1.bf16.msra.mxu0 %v1494
    %1581 = vmatprep.subr.bf16.mxu0 0
    %1582 = vmatpush1.bf16.msra.mxu0 %v1493
    %1583 = vmatprep.subr.bf16.mxu0 0
    %1584 = vmatpush1.bf16.msra.mxu0 %v1492
    %1585 = vmatprep.subr.bf16.mxu0 0
    %1586 = vmatpush1.bf16.msra.mxu0 %v1491
    %1587 = vmatprep.subr.bf16.mxu0 0
    %1588 = vmatpush1.bf16.msra.mxu0 %v1490
    %1589 = vmatprep.subr.bf16.mxu0 0
    %1590 = vmatpush2.bf16.msra.mxu0 0
    %1591 = vmatprep.subr.bf16.mxu0 0
    %1592 = vmatpush2.bf16.msra.mxu0 0
    %1593 = vmatprep.subr.bf16.mxu0 0
    %1594 = vmatpush2.bf16.msra.mxu0 0
    %1595 = vmatprep.subr.bf16.mxu0 0
    %1596 = vmatpush2.bf16.msra.mxu0 0
    %1597 = vmatprep.subr.bf16.mxu0 0
    %1598 = vmatpush2.bf16.msra.mxu0 %v1501
    %1599 = vmatprep.subr.bf16.mxu0 0
    %1600 = vmatpush2.bf16.msra.mxu0 %v1500
    %1601 = vmatprep.subr.bf16.mxu0 0
    %1602 = vmatpush2.bf16.msra.mxu0 %v1499
    %1603 = vmatprep.subr.bf16.mxu0 0
    %1604 = vmatpush2.bf16.msra.mxu0 %v1498
    %1605 = vmatprep.mubr.bf16.mxu0 %v1531
    %1606 = vmatmul.mubr.bf16.gmra.mxu0 %v1360
    %v1607 = vpop.f32.mrf.mxu0
    %v1608 = vadd.f32 %v1568, %v1607
    %v1609 = vpop.f32.mrf.mxu0
    %v1610 = vpop.f32.mrf.mxu0
    %v1611 = vpop.f32.mrf.mxu0
    %1612 = vdwg.mxu0
    %v1613 = vxor.u32 %v1608, 2147483648
    %v1614 = vmul.f32 %v1613, 1.442695
    %v1615 = vpow.pop %v1614
    %v1616 = vadd.f32 %v1615, 1.0
    %v1617 = vrcp.pop %v1616
    %v1618 = vmul.f32 1.0, %v1617
    %v1619 = vlaneseq
    %v1620 = vand.u32 %v1619, 127
    %v1621 = vcvt.f32.s32.to.zero.pseudo %v39
    %v1622 = vsub.s32 %v1621, 1
    %v1623 = vmul.u32 %v1622, 3
    %1624 = vset.pattern.permute.xlu0 1
    %1625 = vperm.xlu0 %1624, %v1623
    %v1626 = vpop.permute.xlu0 %1625
    %vm1627 = vcmp.ge.s32.totalorder %v1620, %v1626
    %v1628 = vadd.s32 %v1623, 3
    %1629 = vset.pattern.permute.xlu0 1
    %1630 = vperm.xlu0 %1629, %v1628
    %v1631 = vpop.permute.xlu0 %1630
    %vm1632 = vcmp.lt.s32.totalorder %v1620, %v1631
    %vm1633 = vmand %vm1627, %vm1632
    %vm1634 = vcmp.lt.s32.totalorder %v1620, 18
    %vm1635 = vmand %vm1633, %vm1634
    %v1636 = vsel %vm1635, %v1618, 0.0
    %1637 = vrot.lane.b32.xlu0 %v1636, 3
    %v1638 = vpop.permute.xlu0 %1637
    %v1639 = vadd.f32 %v1636, %v1638
    %1640 = vrot.lane.b32.xlu0 %v1636, 125
    %v1641 = vpop.permute.xlu0 %1640
    %v1642 = vadd.f32 %v1639, %v1641
    %1643 = vrot.lane.b32.xlu0 %v1636, 6
    %v1644 = vpop.permute.xlu0 %1643
    %v1645 = vadd.f32 %v1642, %v1644
    %1646 = vrot.lane.b32.xlu0 %v1636, 122
    %v1647 = vpop.permute.xlu0 %1646
    %v1648 = vadd.f32 %v1645, %v1647
    %1649 = vrot.lane.b32.xlu0 %v1636, 9
    %v1650 = vpop.permute.xlu0 %1649
    %v1651 = vadd.f32 %v1648, %v1650
    %1652 = vrot.lane.b32.xlu0 %v1636, 119
    %v1653 = vpop.permute.xlu0 %1652
    %v1654 = vadd.f32 %v1651, %v1653
    %1655 = vrot.lane.b32.xlu0 %v1636, 12
    %v1656 = vpop.permute.xlu0 %1655
    %v1657 = vadd.f32 %v1654, %v1656
    %1658 = vrot.lane.b32.xlu0 %v1636, 116
    %v1659 = vpop.permute.xlu0 %1658
    %v1660 = vadd.f32 %v1657, %v1659
    %1661 = vrot.lane.b32.xlu0 %v1636, 15
    %v1662 = vpop.permute.xlu0 %1661
    %v1663 = vadd.f32 %v1660, %v1662
    %1664 = vrot.lane.b32.xlu0 %v1636, 113
    %v1665 = vpop.permute.xlu0 %1664
    %v1666 = vadd.f32 %v1663, %v1665
    %vm1667 = vcmp.lt.s32.totalorder %v1620, 3
    %v1668 = vsel %vm1667, %v1666, 0.0
    %vm1669 = vcmp.eq.s32.totalorder %v1620, 3
    %1671 = vset.pattern.permute.xlu0 18
    %1672 = vperm.xlu0 %1671, %v1608
    %v1673 = vpop.permute.xlu0 %1672
    %v1675 = vsel %vm1669, %v1673, 0.0
    %v1676 = vadd.f32 %v1668, %v1675
    %1677 = vst [vmem:[%s6] sm:$0xff] %v1676
    // Predicated region
    $region30: #{controller_forward.1} parent=1 // pred_check
      _
    $region31: #{controller_forward.1} parent=1 // pred_check_branch
      %1679 = sbr.rel (0) target = $region33
    $region32: #{controller_forward.1} parent=1 // pred_region
      _
    $region33: #{controller_forward.1} parent=1 // pred_fallthru
      _
    // Predicated region
    $region34: #{controller_forward.1} parent=1 // pred_check
      _
    $region35: #{controller_forward.1} parent=1 // pred_check_branch
      %1681 = sbr.rel (0) target = $region37
    $region36: #{controller_forward.1} parent=1 // pred_region
      _
    $region37: #{controller_forward.1} parent=1 // pred_fallthru
      _
    %1682 = vsyncpa [#allocation3], 1

</llo_original>
